<compile_context>
chip_gen: v7x
topology: tpu7x:2x2x1
jax: 0.10.0
libtpu: 0.0.40
codegen_flags: <defaults>
</compile_context>

<pallas_src>
import functools

import jax
import jax.numpy as jnp
from jax.experimental import pallas as pl
from jax.experimental.pallas import tpu as pltpu

_LANE = 128
_SUBLANE = 8
_NEG_BIG = -1e9  # bias for padded logit lanes -> exp() underflows to 0 in softmax


def _round_up(x, m):
    return ((x + m - 1) // m) * m


# ---------------------------------------------------------------------------
# Fused kernel: per time chunk
#   xg    = relu(obs @ Wb + bb) @ Wih + (b_ih + b_hh)          (MXU, hoisted)
#   loop t in chunk:  h, c = lstm_step(xg[t], h, c; Whh)       (serial)
#   probs, logp = softmax(h_stack @ Wl + bl)                   (MXU + VPU/EUP)
# ---------------------------------------------------------------------------
def _fused_actor_kernel(obs_ref, hx_ref, cx_ref,
                        wb_ref, bb_ref, wih_ref, bg_ref, whh_ref,
                        wl_ref, bl_ref,
                        probs_ref, logp_ref,
                        xg_sc, hbuf_sc, h_sc, c_sc,
                        *, chunk, bp, hp, nop, unroll):
    del nop  # output lane width is carried by the refs
    cd = wb_ref.dtype  # MXU operand dtype (f32 or bf16); accumulation stays f32

    # ---- carry init (only on the first time chunk) ----
    @pl.when(pl.program_id(0) == 0)
    def _init_carry():
        h_sc[...] = hx_ref[...].astype(jnp.float32)
        c_sc[...] = cx_ref[...].astype(jnp.float32)

    # ---- fused stage 1: body Linear+ReLU + LSTM input projection ----
    x = jnp.dot(obs_ref[...].astype(cd), wb_ref[...],
                preferred_element_type=jnp.float32)
    x = jnp.maximum(x + bb_ref[...], 0.0)
    xg_sc[...] = jnp.dot(x.astype(cd), wih_ref[...],
                         preferred_element_type=jnp.float32) + bg_ref[...]

    # ---- stage 2: sequential LSTM recurrence over the chunk ----
    # Gate lane packing is [i | f | o | g], each Hp lanes wide.
    # TODO(synk): hold W_hh in MXU weight registers across steps via
    # pltpu.matmul_push_rhs / matmul_acc_lhs / matmul_pop so the loop-invariant
    # (Hp, 4Hp) RHS is not re-staged every step (v5e/v6e critical path win).
    def step(t, carry):
        h, c = carry
        r0 = t * bp                               # sublane-aligned (bp % 8 == 0)
        gates = xg_sc[pl.ds(r0, bp), :] + jnp.dot(
            h.astype(cd), whh_ref[...], preferred_element_type=jnp.float32)
        sig = jax.nn.sigmoid(gates[:, :3 * hp])   # i, f, o in one contiguous op
        i_g = sig[:, 0 * hp:1 * hp]
        f_g = sig[:, 1 * hp:2 * hp]
        o_g = sig[:, 2 * hp:3 * hp]
        g_g = jnp.tanh(gates[:, 3 * hp:4 * hp])
        c = f_g * c + i_g * g_g
        h = o_g * jnp.tanh(c)
        hbuf_sc[pl.ds(r0, bp), :] = h
        return (h, c)

    h_fin, c_fin = jax.lax.fori_loop(0, chunk, step,
                                     (h_sc[...], c_sc[...]), unroll=unroll)
    h_sc[...] = h_fin
    c_sc[...] = c_fin

    # ---- fused stage 3: logits head + softmax (lane-dense, 128-padded) ----
    logits = jnp.dot(hbuf_sc[...].astype(cd), wl_ref[...],
                     preferred_element_type=jnp.float32) + bl_ref[...]
    m = jnp.max(logits, axis=-1, keepdims=True)
    e = jnp.exp(logits - m)
    s = jnp.sum(e, axis=-1, keepdims=True)
    if cd == jnp.bfloat16:
        # already reduced precision -> take the free EUP approximate reciprocal
        probs = e * pl.reciprocal(s, approx=True)
    else:
        probs = e / s                             # exact, matches the reference
    z = jnp.where(probs == 0.0, 1e-8, 0.0)
    logp = jnp.log(probs + z)
    probs_ref[...] = probs.astype(probs_ref.dtype)
    logp_ref[...] = logp.astype(logp_ref.dtype)


# ---------------------------------------------------------------------------
# Wrapper-side parameter preparation: pre-transpose to (in, out), fold biases,
# repack/pad gates to [i | f | o | g] with Hp-lane blocks, pad to (8, 128).
# compute_dtype=jnp.bfloat16 stores the weight slabs in bf16 (halves the
# VMEM/DMA footprint of whh/wih/wb/wl); accumulation stays f32 in the kernel.
# ---------------------------------------------------------------------------
def prepare_actor_params(params, compute_dtype=jnp.float32):
    w_body = jnp.asarray(params["w_body"], jnp.float32)     # (H, f) torch layout
    H, f = w_body.shape
    n_out = params["w_logits"].shape[0]
    Hp = _round_up(H, _LANE)
    Fp = _round_up(f, _LANE)
    NOp = _round_up(n_out, _LANE)
    # TODO(synk): on v6e/v7x pad NOp to 256 to fill the 2x256^2 MXU width for
    # the head matmul (the -1e9 bias trick keeps the extra lanes inert).

    def pad2(x, shape):
        out = jnp.zeros(shape, jnp.float32)
        return out.at[:x.shape[0], :x.shape[1]].set(x)

    # body: (f, H) -> (Fp, Hp)
    wb = pad2(w_body.T, (Fp, Hp))
    bb = jnp.zeros((1, Hp), jnp.float32).at[0, :H].set(
        jnp.asarray(params["b_body"], jnp.float32))

    # PyTorch LSTMCell packs gate rows as [i; f; g; o]; repack columns as
    # [i | f | o | g], each gate block padded to Hp lanes.
    order = (0, 1, 3, 2)  # i, f, o, g

    def pack_gate_matrix(w):                      # w: (4H, in_dim) torch layout
        wt = jnp.asarray(w, jnp.float32).T        # (in_dim, 4H)
        in_dim = wt.shape[0]
        in_p = _round_up(in_dim, _LANE)
        out = jnp.zeros((in_p, 4 * Hp), jnp.float32)
        for dst, src in enumerate(order):
            out = out.at[:in_dim, dst * Hp:dst * Hp + H].set(
                wt[:, src * H:(src + 1) * H])
        return out

    def pack_gate_bias(b):
        b = jnp.asarray(b, jnp.float32)
        out = jnp.zeros((1, 4 * Hp), jnp.float32)
        for dst, src in enumerate(order):
            out = out.at[0, dst * Hp:dst * Hp + H].set(b[src * H:(src + 1) * H])
        return out

    wih = pack_gate_matrix(params["w_ih"])
    whh = pack_gate_matrix(params["w_hh"])
    bg = pack_gate_bias(jnp.asarray(params["b_ih"]) + jnp.asarray(params["b_hh"]))

    # logits head: (H, n_out) -> (Hp, NOp); padded lanes get -1e9 bias.
    wl = pad2(jnp.asarray(params["w_logits"], jnp.float32).T, (Hp, NOp))
    bl = jnp.full((1, NOp), _NEG_BIG, jnp.float32).at[0, :n_out].set(
        jnp.asarray(params["b_logits"], jnp.float32))

    cd = jnp.dtype(compute_dtype)
    return dict(
        wb=wb.astype(cd), wih=wih.astype(cd), whh=whh.astype(cd),
        wl=wl.astype(cd),
        bb=bb, bg=bg, bl=bl,                      # biases / -1e9 mask stay f32
        H=H, Hp=Hp, f=f, Fp=Fp, n_out=n_out, n_out_p=NOp)


def mlp_lstm_actor_forward(obs, lstm_hxs, prepped, *, chunk_t=8):
    """MlpLSTMActor.forward -> (probs, log_probs), each (batch, seq, n_outputs)."""
    hx, cx = lstm_hxs
    batch, seq, f = obs.shape
    H, Hp, Fp = prepped["H"], prepped["Hp"], prepped["Fp"]
    NO, NOp = prepped["n_out"], prepped["n_out_p"]
    Bp = _round_up(batch, _SUBLANE)

    chunk = max(1, min(chunk_t, seq))             # time-chunk size T
    seq_p = _round_up(seq, chunk)                 # padded steps are discarded
    n_chunks = seq_p // chunk
    unroll = True if chunk <= 8 else 8            # bounded unroll of the recurrence
    rows = chunk * Bp                             # rows per chunk
    R = seq_p * Bp

    # Time-major, zero-padded obs -> (seq_p * Bp, Fp) rows grouped by time chunk.
    obs_tm = jnp.transpose(jnp.asarray(obs, jnp.float32), (1, 0, 2))
    obs_tm = jnp.pad(obs_tm, ((0, seq_p - seq), (0, Bp - batch), (0, Fp - f)))
    obs_2d = obs_tm.reshape(R, Fp)

    hx_p = jnp.pad(jnp.asarray(hx, jnp.float32), ((0, Bp - batch), (0, Hp - H)))
    cx_p = jnp.pad(jnp.asarray(cx, jnp.float32), ((0, Bp - batch), (0, Hp - H)))

    kernel = functools.partial(_fused_actor_kernel, chunk=chunk, bp=Bp,
                               hp=Hp, nop=NOp, unroll=unroll)

    def const_spec(shape):                        # VMEM-resident across the grid
        return pl.BlockSpec(shape, lambda t: (0, 0))

    probs_p, logp_p = pl.pallas_call(
        kernel,
        out_shape=(jax.ShapeDtypeStruct((R, NOp), jnp.float32),
                   jax.ShapeDtypeStruct((R, NOp), jnp.float32)),
        grid_spec=pltpu.PrefetchScalarGridSpec(
            num_scalar_prefetch=0,
            grid=(n_chunks,),
            in_specs=[
                pl.BlockSpec((rows, Fp), lambda t: (t, 0)),   # obs (per chunk)
                const_spec((Bp, Hp)),                         # hx
                const_spec((Bp, Hp)),                         # cx
                const_spec((Fp, Hp)),                         # wb
                const_spec((1, Hp)),                          # bb
                const_spec((Hp, 4 * Hp)),                     # wih
                const_spec((1, 4 * Hp)),                      # bg (= b_ih + b_hh)
                const_spec((Hp, 4 * Hp)),                     # whh
                const_spec((Hp, NOp)),                        # wl
                const_spec((1, NOp)),                         # bl (+ -1e9 mask)
            ],
            out_specs=[pl.BlockSpec((rows, NOp), lambda t: (t, 0)),
                       pl.BlockSpec((rows, NOp), lambda t: (t, 0))],
            scratch_shapes=[
                pltpu.VMEM((rows, 4 * Hp), jnp.float32),      # xg for the chunk
                pltpu.VMEM((rows, Hp), jnp.float32),          # h stack for the head
                pltpu.VMEM((Bp, Hp), jnp.float32),            # persistent h carry
                pltpu.VMEM((Bp, Hp), jnp.float32),            # persistent c carry
            ]),
        # Time carries the h/c recurrence -> sequential ("arbitrary").
        compiler_params=pltpu.CompilerParams(
            dimension_semantics=("arbitrary",)),
    )(obs_2d, hx_p, cx_p,
      prepped["wb"], prepped["bb"], prepped["wih"], prepped["bg"],
      prepped["whh"], prepped["wl"], prepped["bl"])

    # Un-pad and return to (batch, seq, n_outputs).
    def unpad(y):
        y = y.reshape(seq_p, Bp, NOp)[:seq, :batch, :NO]
        return jnp.transpose(y, (1, 0, 2))

    return unpad(probs_p), unpad(logp_p)


def init_actor_params(key, f, n_outputs, hidden):
    """Deterministic synthetic parameter init (PyTorch Linear/LSTMCell shapes)."""
    ks = jax.random.split(key, 8)
    s = 0.1
    return {
        "w_body": s * jax.random.normal(ks[0], (hidden, f), jnp.float32),
        "b_body": s * jax.random.normal(ks[1], (hidden,), jnp.float32),
        "w_ih": s * jax.random.normal(ks[2], (4 * hidden, hidden), jnp.float32),
        "b_ih": s * jax.random.normal(ks[3], (4 * hidden,), jnp.float32),
        "w_hh": s * jax.random.normal(ks[4], (4 * hidden, hidden), jnp.float32),
        "b_hh": s * jax.random.normal(ks[5], (4 * hidden,), jnp.float32),
        "w_logits": s * jax.random.normal(ks[6], (n_outputs, hidden), jnp.float32),
        "b_logits": s * jax.random.normal(ks[7], (n_outputs,), jnp.float32),
    }


def ref_actor(obs, hx, cx, p):
    """Pure-JAX reference reproducing the PyTorch MlpLSTMActor.forward semantics."""
    H = hx.shape[-1]
    x = jnp.maximum(obs @ p["w_body"].T + p["b_body"], 0.0)  # (B, S, H)
    outs = []
    h, c = hx, cx
    for t in range(obs.shape[1]):
        g = (x[:, t] @ p["w_ih"].T + p["b_ih"]
             + h @ p["w_hh"].T + p["b_hh"])
        i_g = jax.nn.sigmoid(g[:, 0 * H:1 * H])
        f_g = jax.nn.sigmoid(g[:, 1 * H:2 * H])
        g_g = jnp.tanh(g[:, 2 * H:3 * H])
        o_g = jax.nn.sigmoid(g[:, 3 * H:4 * H])
        c = f_g * c + i_g * g_g
        h = o_g * jnp.tanh(c)
        outs.append(h)
    out = jnp.stack(outs, axis=1)                             # (B, S, H)
    logits = out @ p["w_logits"].T + p["b_logits"]
    m = jnp.max(logits, axis=-1, keepdims=True)
    e = jnp.exp(logits - m)
    pr = e / jnp.sum(e, axis=-1, keepdims=True)
    z = jnp.where(pr == 0.0, 1e-8, 0.0)
    return pr, jnp.log(pr + z)


if __name__ == "__main__":
    batch, seq, f, hidden, n_outputs = 2, 8, 4, 32, 3

    key = jax.random.PRNGKey(0)
    k_obs, k_hx, k_cx, k_p = jax.random.split(key, 4)

    obs = jax.random.normal(k_obs, (batch, seq, f), jnp.float32)
    hx = jax.random.normal(k_hx, (batch, hidden), jnp.float32)
    cx = jax.random.normal(k_cx, (batch, hidden), jnp.float32)

    params = init_actor_params(k_p, f, n_outputs, hidden)
    ref_probs, ref_logp = ref_actor(obs, hx, cx, params)

    # f32 compute path (numerically faithful to the reference); chunk_t=4 so the
    # grid has 2 steps and the persistent h/c carry + pipelining are exercised.
    prepped = prepare_actor_params(params, compute_dtype=jnp.float32)
    probs, log_probs = mlp_lstm_actor_forward(obs, (hx, cx), prepped, chunk_t=4)
    jax.block_until_ready((probs, log_probs))

    assert probs.shape == (batch, seq, n_outputs)
    assert log_probs.shape == (batch, seq, n_outputs)
    assert jnp.allclose(probs, ref_probs, atol=1e-4, rtol=1e-4)
    assert jnp.allclose(log_probs, ref_logp, atol=1e-4, rtol=1e-4)

    # bf16 MXU-operand path (f32 accumulation / carries) -- looser tolerance.
    prepped_bf16 = prepare_actor_params(params, compute_dtype=jnp.bfloat16)
    probs_b, logp_b = mlp_lstm_actor_forward(obs, (hx, cx), prepped_bf16,
                                             chunk_t=4)
    jax.block_until_ready((probs_b, logp_b))
    assert jnp.allclose(probs_b, ref_probs, atol=5e-2, rtol=5e-2)
    assert jnp.allclose(logp_b, ref_logp, atol=5e-2, rtol=5e-2)

    print("KERNEL_OK")
</pallas_src>

<mosaic_0001>
module attributes {stable_mosaic.version = 11 : i64} {
  func.func @_fused_actor_kernel(%arg0: i32, %arg1: memref<32x128xf32, #tpu.memory_space<vmem>>, %arg2: memref<8x128xf32, #tpu.memory_space<vmem>>, %arg3: memref<8x128xf32, #tpu.memory_space<vmem>>, %arg4: memref<128x128xf32, #tpu.memory_space<vmem>>, %arg5: memref<1x128xf32, #tpu.memory_space<vmem>>, %arg6: memref<128x512xf32, #tpu.memory_space<vmem>>, %arg7: memref<1x512xf32, #tpu.memory_space<vmem>>, %arg8: memref<128x512xf32, #tpu.memory_space<vmem>>, %arg9: memref<128x128xf32, #tpu.memory_space<vmem>>, %arg10: memref<1x128xf32, #tpu.memory_space<vmem>>, %arg11: memref<32x128xf32, #tpu.memory_space<vmem>>, %arg12: memref<32x128xf32, #tpu.memory_space<vmem>>, %arg13: memref<32x512xf32, #tpu.memory_space<vmem>>, %arg14: memref<32x128xf32, #tpu.memory_space<vmem>>, %arg15: memref<8x128xf32, #tpu.memory_space<vmem>>, %arg16: memref<8x128xf32, #tpu.memory_space<vmem>>) attributes {dimension_semantics = [#tpu.dimension_semantics<arbitrary>], iteration_bounds = array<i64: 2>, scalar_prefetch = 0 : i64, scratch_operands = 4 : i64, tpu.core_type = #tpu.core_type<tc>, window_params = [{transform_indices = @transform_0, window_bounds = array<i64: 32, 128>}, {pipeline_mode = #tpu.pipeline_mode<synchronous>, transform_indices = @transform_1, window_bounds = array<i64: 8, 128>}, {pipeline_mode = #tpu.pipeline_mode<synchronous>, transform_indices = @transform_2, window_bounds = array<i64: 8, 128>}, {pipeline_mode = #tpu.pipeline_mode<synchronous>, transform_indices = @transform_3, window_bounds = array<i64: 128, 128>}, {pipeline_mode = #tpu.pipeline_mode<synchronous>, transform_indices = @transform_4, window_bounds = array<i64: 1, 128>}, {pipeline_mode = #tpu.pipeline_mode<synchronous>, transform_indices = @transform_5, window_bounds = array<i64: 128, 512>}, {pipeline_mode = #tpu.pipeline_mode<synchronous>, transform_indices = @transform_6, window_bounds = array<i64: 1, 512>}, {pipeline_mode = #tpu.pipeline_mode<synchronous>, transform_indices = @transform_7, window_bounds = array<i64: 128, 512>}, {pipeline_mode = #tpu.pipeline_mode<synchronous>, transform_indices = @transform_8, window_bounds = array<i64: 128, 128>}, {pipeline_mode = #tpu.pipeline_mode<synchronous>, transform_indices = @transform_9, window_bounds = array<i64: 1, 128>}, {transform_indices = @transform_10, window_bounds = array<i64: 32, 128>}, {transform_indices = @transform_11, window_bounds = array<i64: 32, 128>}]} {
    %c0_i32 = arith.constant 0 : i32
    %0 = arith.cmpi eq, %arg0, %c0_i32 : i32
    %1 = arith.extui %0 : i1 to i32
    %c0_i32_0 = arith.constant 0 : i32
    %2 = arith.cmpi ne, %1, %c0_i32_0 : i32
    scf.if %2 {
      %c0_66 = arith.constant 0 : index
      %c0_67 = arith.constant 0 : index
      %141 = vector.load %arg2[%c0_66, %c0_67] : memref<8x128xf32, #tpu.memory_space<vmem>>, vector<8x128xf32>
      %c0_68 = arith.constant 0 : index
      %c0_69 = arith.constant 0 : index
      %142 = vector.load %arg15[%c0_68, %c0_69] : memref<8x128xf32, #tpu.memory_space<vmem>>, vector<8x128xf32>
      tpu.vector_store %arg15[%c0_68, %c0_69], %141 {strides = array<i32>} : memref<8x128xf32, #tpu.memory_space<vmem>>, vector<8x128xf32>,
      %c0_70 = arith.constant 0 : index
      %c0_71 = arith.constant 0 : index
      %143 = vector.load %arg3[%c0_70, %c0_71] : memref<8x128xf32, #tpu.memory_space<vmem>>, vector<8x128xf32>
      %c0_72 = arith.constant 0 : index
      %c0_73 = arith.constant 0 : index
      %144 = vector.load %arg16[%c0_72, %c0_73] : memref<8x128xf32, #tpu.memory_space<vmem>>, vector<8x128xf32>
      tpu.vector_store %arg16[%c0_72, %c0_73], %143 {strides = array<i32>} : memref<8x128xf32, #tpu.memory_space<vmem>>, vector<8x128xf32>,
    } else {
    }
    %c0 = arith.constant 0 : index
    %c0_1 = arith.constant 0 : index
    %3 = vector.load %arg1[%c0, %c0_1] : memref<32x128xf32, #tpu.memory_space<vmem>>, vector<32x128xf32>
    %c0_2 = arith.constant 0 : index
    %c0_3 = arith.constant 0 : index
    %4 = vector.load %arg4[%c0_2, %c0_3] : memref<128x128xf32, #tpu.memory_space<vmem>>, vector<128x128xf32>
    %cst = arith.constant dense<0.000000e+00> : vector<32x128xf32>
    %5 = tpu.matmul %3, %4, %cst {dimension_numbers = #tpu.dot_dimension_numbers<[1], [0], [0], [1], [0, 0, 1, 1], [], []>} : vector<32x128xf32>, vector<128x128xf32>, vector<32x128xf32> -> vector<32x128xf32>
    %c0_4 = arith.constant 0 : index
    %c0_5 = arith.constant 0 : index
    %6 = vector.load %arg5[%c0_4, %c0_5] : memref<1x128xf32, #tpu.memory_space<vmem>>, vector<1x128xf32>
    %7 = vector.broadcast %6 : vector<1x128xf32> to vector<32x128xf32>
    %8 = arith.addf %5, %7 : vector<32x128xf32>
    %cst_6 = arith.constant 0.000000e+00 : f32
    %9 = vector.broadcast %cst_6 : f32 to vector<32x128xf32>
    %10 = arith.maximumf %8, %9 : vector<32x128xf32>
    %c0_7 = arith.constant 0 : index
    %c0_8 = arith.constant 0 : index
    %11 = vector.load %arg6[%c0_7, %c0_8] : memref<128x512xf32, #tpu.memory_space<vmem>>, vector<128x512xf32>
    %cst_9 = arith.constant dense<0.000000e+00> : vector<32x512xf32>
    %12 = tpu.matmul %10, %11, %cst_9 {dimension_numbers = #tpu.dot_dimension_numbers<[1], [0], [0], [1], [0, 0, 1, 1], [], []>} : vector<32x128xf32>, vector<128x512xf32>, vector<32x512xf32> -> vector<32x512xf32>
    %c0_10 = arith.constant 0 : index
    %c0_11 = arith.constant 0 : index
    %13 = vector.load %arg7[%c0_10, %c0_11] : memref<1x512xf32, #tpu.memory_space<vmem>>, vector<1x512xf32>
    %14 = vector.broadcast %13 : vector<1x512xf32> to vector<32x512xf32>
    %15 = arith.addf %12, %14 : vector<32x512xf32>
    %c0_12 = arith.constant 0 : index
    %c0_13 = arith.constant 0 : index
    %16 = vector.load %arg13[%c0_12, %c0_13] : memref<32x512xf32, #tpu.memory_space<vmem>>, vector<32x512xf32>
    tpu.vector_store %arg13[%c0_12, %c0_13], %15 {strides = array<i32>} : memref<32x512xf32, #tpu.memory_space<vmem>>, vector<32x512xf32>,
    %c0_14 = arith.constant 0 : index
    %c0_15 = arith.constant 0 : index
    %17 = vector.load %arg15[%c0_14, %c0_15] : memref<8x128xf32, #tpu.memory_space<vmem>>, vector<8x128xf32>
    %c0_16 = arith.constant 0 : index
    %c0_17 = arith.constant 0 : index
    %18 = vector.load %arg16[%c0_16, %c0_17] : memref<8x128xf32, #tpu.memory_space<vmem>>, vector<8x128xf32>
    %c0_i32_18 = arith.constant 0 : i32
    %c8_i32 = arith.constant 8 : i32
    %19 = arith.muli %c0_i32_18, %c8_i32 : i32
    %20 = arith.index_cast %19 : i32 to index
    %c0_19 = arith.constant 0 : index
    %21 = vector.load %arg13[%20, %c0_19] : memref<32x512xf32, #tpu.memory_space<vmem>>, vector<8x512xf32>
    %c0_20 = arith.constant 0 : index
    %c0_21 = arith.constant 0 : index
    %22 = vector.load %arg8[%c0_20, %c0_21] : memref<128x512xf32, #tpu.memory_space<vmem>>, vector<128x512xf32>
    %cst_22 = arith.constant dense<0.000000e+00> : vector<8x512xf32>
    %23 = tpu.matmul %17, %22, %cst_22 {dimension_numbers = #tpu.dot_dimension_numbers<[1], [0], [0], [1], [0, 0, 1, 1], [], []>} : vector<8x128xf32>, vector<128x512xf32>, vector<8x512xf32> -> vector<8x512xf32>
    %24 = arith.addf %21, %23 : vector<8x512xf32>
    %25 = vector.extract_strided_slice %24 {offsets = [0, 0], sizes = [8, 384], strides = [1, 1]} : vector<8x512xf32> to vector<8x384xf32>
    %26 = arith.negf %25 : vector<8x384xf32>
    %27 = math.exp %26 : vector<8x384xf32>
    %cst_23 = arith.constant 1.000000e+00 : f32
    %28 = vector.broadcast %cst_23 : f32 to vector<8x384xf32>
    %29 = arith.addf %28, %27 : vector<8x384xf32>
    %30 = arith.divf %28, %29 : vector<8x384xf32>
    %31 = vector.extract_strided_slice %30 {offsets = [0, 0], sizes = [8, 128], strides = [1, 1]} : vector<8x384xf32> to vector<8x128xf32>
    %32 = vector.extract_strided_slice %30 {offsets = [0, 128], sizes = [8, 128], strides = [1, 1]} : vector<8x384xf32> to vector<8x128xf32>
    %33 = vector.extract_strided_slice %30 {offsets = [0, 256], sizes = [8, 128], strides = [1, 1]} : vector<8x384xf32> to vector<8x128xf32>
    %34 = vector.extract_strided_slice %24 {offsets = [0, 384], sizes = [8, 128], strides = [1, 1]} : vector<8x512xf32> to vector<8x128xf32>
    %35 = math.tanh %34 : vector<8x128xf32>
    %36 = arith.mulf %32, %18 : vector<8x128xf32>
    %37 = arith.mulf %31, %35 : vector<8x128xf32>
    %38 = arith.addf %36, %37 : vector<8x128xf32>
    %39 = math.tanh %38 : vector<8x128xf32>
    %40 = arith.mulf %33, %39 : vector<8x128xf32>
    %41 = arith.index_cast %19 : i32 to index
    %c0_24 = arith.constant 0 : index
    %42 = vector.load %arg14[%41, %c0_24] : memref<32x128xf32, #tpu.memory_space<vmem>>, vector<8x128xf32>
    tpu.vector_store %arg14[%41, %c0_24], %40 {strides = array<i32>} : memref<32x128xf32, #tpu.memory_space<vmem>>, vector<8x128xf32>,
    %c1_i32 = arith.constant 1 : i32
    %c8_i32_25 = arith.constant 8 : i32
    %43 = arith.muli %c1_i32, %c8_i32_25 : i32
    %44 = arith.index_cast %43 : i32 to index
    %c0_26 = arith.constant 0 : index
    %45 = vector.load %arg13[%44, %c0_26] : memref<32x512xf32, #tpu.memory_space<vmem>>, vector<8x512xf32>
    %c0_27 = arith.constant 0 : index
    %c0_28 = arith.constant 0 : index
    %46 = vector.load %arg8[%c0_27, %c0_28] : memref<128x512xf32, #tpu.memory_space<vmem>>, vector<128x512xf32>
    %cst_29 = arith.constant dense<0.000000e+00> : vector<8x512xf32>
    %47 = tpu.matmul %40, %46, %cst_29 {dimension_numbers = #tpu.dot_dimension_numbers<[1], [0], [0], [1], [0, 0, 1, 1], [], []>} : vector<8x128xf32>, vector<128x512xf32>, vector<8x512xf32> -> vector<8x512xf32>
    %48 = arith.addf %45, %47 : vector<8x512xf32>
    %49 = vector.extract_strided_slice %48 {offsets = [0, 0], sizes = [8, 384], strides = [1, 1]} : vector<8x512xf32> to vector<8x384xf32>
    %50 = arith.negf %49 : vector<8x384xf32>
    %51 = math.exp %50 : vector<8x384xf32>
    %cst_30 = arith.constant 1.000000e+00 : f32
    %52 = vector.broadcast %cst_30 : f32 to vector<8x384xf32>
    %53 = arith.addf %52, %51 : vector<8x384xf32>
    %54 = arith.divf %52, %53 : vector<8x384xf32>
    %55 = vector.extract_strided_slice %54 {offsets = [0, 0], sizes = [8, 128], strides = [1, 1]} : vector<8x384xf32> to vector<8x128xf32>
    %56 = vector.extract_strided_slice %54 {offsets = [0, 128], sizes = [8, 128], strides = [1, 1]} : vector<8x384xf32> to vector<8x128xf32>
    %57 = vector.extract_strided_slice %54 {offsets = [0, 256], sizes = [8, 128], strides = [1, 1]} : vector<8x384xf32> to vector<8x128xf32>
    %58 = vector.extract_strided_slice %48 {offsets = [0, 384], sizes = [8, 128], strides = [1, 1]} : vector<8x512xf32> to vector<8x128xf32>
    %59 = math.tanh %58 : vector<8x128xf32>
    %60 = arith.mulf %56, %38 : vector<8x128xf32>
    %61 = arith.mulf %55, %59 : vector<8x128xf32>
    %62 = arith.addf %60, %61 : vector<8x128xf32>
    %63 = math.tanh %62 : vector<8x128xf32>
    %64 = arith.mulf %57, %63 : vector<8x128xf32>
    %65 = arith.index_cast %43 : i32 to index
    %c0_31 = arith.constant 0 : index
    %66 = vector.load %arg14[%65, %c0_31] : memref<32x128xf32, #tpu.memory_space<vmem>>, vector<8x128xf32>
    tpu.vector_store %arg14[%65, %c0_31], %64 {strides = array<i32>} : memref<32x128xf32, #tpu.memory_space<vmem>>, vector<8x128xf32>,
    %c2_i32 = arith.constant 2 : i32
    %c8_i32_32 = arith.constant 8 : i32
    %67 = arith.muli %c2_i32, %c8_i32_32 : i32
    %68 = arith.index_cast %67 : i32 to index
    %c0_33 = arith.constant 0 : index
    %69 = vector.load %arg13[%68, %c0_33] : memref<32x512xf32, #tpu.memory_space<vmem>>, vector<8x512xf32>
    %c0_34 = arith.constant 0 : index
    %c0_35 = arith.constant 0 : index
    %70 = vector.load %arg8[%c0_34, %c0_35] : memref<128x512xf32, #tpu.memory_space<vmem>>, vector<128x512xf32>
    %cst_36 = arith.constant dense<0.000000e+00> : vector<8x512xf32>
    %71 = tpu.matmul %64, %70, %cst_36 {dimension_numbers = #tpu.dot_dimension_numbers<[1], [0], [0], [1], [0, 0, 1, 1], [], []>} : vector<8x128xf32>, vector<128x512xf32>, vector<8x512xf32> -> vector<8x512xf32>
    %72 = arith.addf %69, %71 : vector<8x512xf32>
    %73 = vector.extract_strided_slice %72 {offsets = [0, 0], sizes = [8, 384], strides = [1, 1]} : vector<8x512xf32> to vector<8x384xf32>
    %74 = arith.negf %73 : vector<8x384xf32>
    %75 = math.exp %74 : vector<8x384xf32>
    %cst_37 = arith.constant 1.000000e+00 : f32
    %76 = vector.broadcast %cst_37 : f32 to vector<8x384xf32>
    %77 = arith.addf %76, %75 : vector<8x384xf32>
    %78 = arith.divf %76, %77 : vector<8x384xf32>
    %79 = vector.extract_strided_slice %78 {offsets = [0, 0], sizes = [8, 128], strides = [1, 1]} : vector<8x384xf32> to vector<8x128xf32>
    %80 = vector.extract_strided_slice %78 {offsets = [0, 128], sizes = [8, 128], strides = [1, 1]} : vector<8x384xf32> to vector<8x128xf32>
    %81 = vector.extract_strided_slice %78 {offsets = [0, 256], sizes = [8, 128], strides = [1, 1]} : vector<8x384xf32> to vector<8x128xf32>
    %82 = vector.extract_strided_slice %72 {offsets = [0, 384], sizes = [8, 128], strides = [1, 1]} : vector<8x512xf32> to vector<8x128xf32>
    %83 = math.tanh %82 : vector<8x128xf32>
    %84 = arith.mulf %80, %62 : vector<8x128xf32>
    %85 = arith.mulf %79, %83 : vector<8x128xf32>
    %86 = arith.addf %84, %85 : vector<8x128xf32>
    %87 = math.tanh %86 : vector<8x128xf32>
    %88 = arith.mulf %81, %87 : vector<8x128xf32>
    %89 = arith.index_cast %67 : i32 to index
    %c0_38 = arith.constant 0 : index
    %90 = vector.load %arg14[%89, %c0_38] : memref<32x128xf32, #tpu.memory_space<vmem>>, vector<8x128xf32>
    tpu.vector_store %arg14[%89, %c0_38], %88 {strides = array<i32>} : memref<32x128xf32, #tpu.memory_space<vmem>>, vector<8x128xf32>,
    %c3_i32 = arith.constant 3 : i32
    %c8_i32_39 = arith.constant 8 : i32
    %91 = arith.muli %c3_i32, %c8_i32_39 : i32
    %92 = arith.index_cast %91 : i32 to index
    %c0_40 = arith.constant 0 : index
    %93 = vector.load %arg13[%92, %c0_40] : memref<32x512xf32, #tpu.memory_space<vmem>>, vector<8x512xf32>
    %c0_41 = arith.constant 0 : index
    %c0_42 = arith.constant 0 : index
    %94 = vector.load %arg8[%c0_41, %c0_42] : memref<128x512xf32, #tpu.memory_space<vmem>>, vector<128x512xf32>
    %cst_43 = arith.constant dense<0.000000e+00> : vector<8x512xf32>
    %95 = tpu.matmul %88, %94, %cst_43 {dimension_numbers = #tpu.dot_dimension_numbers<[1], [0], [0], [1], [0, 0, 1, 1], [], []>} : vector<8x128xf32>, vector<128x512xf32>, vector<8x512xf32> -> vector<8x512xf32>
    %96 = arith.addf %93, %95 : vector<8x512xf32>
    %97 = vector.extract_strided_slice %96 {offsets = [0, 0], sizes = [8, 384], strides = [1, 1]} : vector<8x512xf32> to vector<8x384xf32>
    %98 = arith.negf %97 : vector<8x384xf32>
    %99 = math.exp %98 : vector<8x384xf32>
    %cst_44 = arith.constant 1.000000e+00 : f32
    %100 = vector.broadcast %cst_44 : f32 to vector<8x384xf32>
    %101 = arith.addf %100, %99 : vector<8x384xf32>
    %102 = arith.divf %100, %101 : vector<8x384xf32>
    %103 = vector.extract_strided_slice %102 {offsets = [0, 0], sizes = [8, 128], strides = [1, 1]} : vector<8x384xf32> to vector<8x128xf32>
    %104 = vector.extract_strided_slice %102 {offsets = [0, 128], sizes = [8, 128], strides = [1, 1]} : vector<8x384xf32> to vector<8x128xf32>
    %105 = vector.extract_strided_slice %102 {offsets = [0, 256], sizes = [8, 128], strides = [1, 1]} : vector<8x384xf32> to vector<8x128xf32>
    %106 = vector.extract_strided_slice %96 {offsets = [0, 384], sizes = [8, 128], strides = [1, 1]} : vector<8x512xf32> to vector<8x128xf32>
    %107 = math.tanh %106 : vector<8x128xf32>
    %108 = arith.mulf %104, %86 : vector<8x128xf32>
    %109 = arith.mulf %103, %107 : vector<8x128xf32>
    %110 = arith.addf %108, %109 : vector<8x128xf32>
    %111 = math.tanh %110 : vector<8x128xf32>
    %112 = arith.mulf %105, %111 : vector<8x128xf32>
    %113 = arith.index_cast %91 : i32 to index
    %c0_45 = arith.constant 0 : index
    %114 = vector.load %arg14[%113, %c0_45] : memref<32x128xf32, #tpu.memory_space<vmem>>, vector<8x128xf32>
    tpu.vector_store %arg14[%113, %c0_45], %112 {strides = array<i32>} : memref<32x128xf32, #tpu.memory_space<vmem>>, vector<8x128xf32>,
    %c4_i32 = arith.constant 4 : i32
    %c0_46 = arith.constant 0 : index
    %c0_47 = arith.constant 0 : index
    %115 = vector.load %arg15[%c0_46, %c0_47] : memref<8x128xf32, #tpu.memory_space<vmem>>, vector<8x128xf32>
    tpu.vector_store %arg15[%c0_46, %c0_47], %112 {strides = array<i32>} : memref<8x128xf32, #tpu.memory_space<vmem>>, vector<8x128xf32>,
    %c0_48 = arith.constant 0 : index
    %c0_49 = arith.constant 0 : index
    %116 = vector.load %arg16[%c0_48, %c0_49] : memref<8x128xf32, #tpu.memory_space<vmem>>, vector<8x128xf32>
    tpu.vector_store %arg16[%c0_48, %c0_49], %110 {strides = array<i32>} : memref<8x128xf32, #tpu.memory_space<vmem>>, vector<8x128xf32>,
    %c0_50 = arith.constant 0 : index
    %c0_51 = arith.constant 0 : index
    %117 = vector.load %arg14[%c0_50, %c0_51] : memref<32x128xf32, #tpu.memory_space<vmem>>, vector<32x128xf32>
    %c0_52 = arith.constant 0 : index
    %c0_53 = arith.constant 0 : index
    %118 = vector.load %arg9[%c0_52, %c0_53] : memref<128x128xf32, #tpu.memory_space<vmem>>, vector<128x128xf32>
    %cst_54 = arith.constant dense<0.000000e+00> : vector<32x128xf32>
    %119 = tpu.matmul %117, %118, %cst_54 {dimension_numbers = #tpu.dot_dimension_numbers<[1], [0], [0], [1], [0, 0, 1, 1], [], []>} : vector<32x128xf32>, vector<128x128xf32>, vector<32x128xf32> -> vector<32x128xf32>
    %c0_55 = arith.constant 0 : index
    %c0_56 = arith.constant 0 : index
    %120 = vector.load %arg10[%c0_55, %c0_56] : memref<1x128xf32, #tpu.memory_space<vmem>>, vector<1x128xf32>
    %121 = vector.broadcast %120 : vector<1x128xf32> to vector<32x128xf32>
    %122 = arith.addf %119, %121 : vector<32x128xf32>
    %cst_57 = arith.constant dense<0xFF800000> : vector<32xf32>
    %123 = vector.multi_reduction <maximumf>, %122, %cst_57 [1] : vector<32x128xf32> to vector<32xf32>
    %124 = vector.shape_cast %123 : vector<32xf32> to vector<32x1xf32>
    %125 = vector.broadcast %124 : vector<32x1xf32> to vector<32x128xf32>
    %126 = arith.subf %122, %125 : vector<32x128xf32>
    %127 = math.exp %126 : vector<32x128xf32>
    %cst_58 = arith.constant dense<0.000000e+00> : vector<32xf32>
    %128 = vector.multi_reduction <add>, %127, %cst_58 [1] : vector<32x128xf32> to vector<32xf32>
    %129 = vector.shape_cast %128 : vector<32xf32> to vector<32x1xf32>
    %130 = vector.broadcast %129 : vector<32x1xf32> to vector<32x128xf32>
    %131 = arith.divf %127, %130 : vector<32x128xf32>
    %cst_59 = arith.constant 0.000000e+00 : f32
    %132 = vector.broadcast %cst_59 : f32 to vector<32x128xf32>
    %133 = arith.cmpf oeq, %131, %132 : vector<32x128xf32>
    %cst_60 = arith.constant 9.99999993E-9 : f32
    %cst_61 = arith.constant 0.000000e+00 : f32
    %134 = vector.broadcast %cst_60 : f32 to vector<32x128xf32>
    %135 = vector.broadcast %cst_61 : f32 to vector<32x128xf32>
    %136 = arith.select %133, %134, %135 : vector<32x128xi1>, vector<32x128xf32>
    %137 = arith.addf %131, %136 : vector<32x128xf32>
    %138 = math.log %137 : vector<32x128xf32>
    %c0_62 = arith.constant 0 : index
    %c0_63 = arith.constant 0 : index
    %139 = vector.load %arg11[%c0_62, %c0_63] : memref<32x128xf32, #tpu.memory_space<vmem>>, vector<32x128xf32>
    tpu.vector_store %arg11[%c0_62, %c0_63], %131 {strides = array<i32>} : memref<32x128xf32, #tpu.memory_space<vmem>>, vector<32x128xf32>,
    %c0_64 = arith.constant 0 : index
    %c0_65 = arith.constant 0 : index
    %140 = vector.load %arg12[%c0_64, %c0_65] : memref<32x128xf32, #tpu.memory_space<vmem>>, vector<32x128xf32>
    tpu.vector_store %arg12[%c0_64, %c0_65], %138 {strides = array<i32>} : memref<32x128xf32, #tpu.memory_space<vmem>>, vector<32x128xf32>,
    return
  }
  func.func @transform_0(%arg0: i32) -> (i32, i32) {
    %c0_i32 = arith.constant 0 : i32
    %c0_i32_0 = arith.constant 0 : i32
    return %arg0, %c0_i32 : i32, i32
  }
  func.func @transform_1(%arg0: i32) -> (i32, i32) {
    %c0_i32 = arith.constant 0 : i32
    %c0_i32_0 = arith.constant 0 : i32
    %c0_i32_1 = arith.constant 0 : i32
    return %c0_i32, %c0_i32_0 : i32, i32
  }
  func.func @transform_2(%arg0: i32) -> (i32, i32) {
    %c0_i32 = arith.constant 0 : i32
    %c0_i32_0 = arith.constant 0 : i32
    %c0_i32_1 = arith.constant 0 : i32
    return %c0_i32, %c0_i32_0 : i32, i32
  }
  func.func @transform_3(%arg0: i32) -> (i32, i32) {
    %c0_i32 = arith.constant 0 : i32
    %c0_i32_0 = arith.constant 0 : i32
    %c0_i32_1 = arith.constant 0 : i32
    return %c0_i32, %c0_i32_0 : i32, i32
  }
  func.func @transform_4(%arg0: i32) -> (i32, i32) {
    %c0_i32 = arith.constant 0 : i32
    %c0_i32_0 = arith.constant 0 : i32
    %c0_i32_1 = arith.constant 0 : i32
    return %c0_i32, %c0_i32_0 : i32, i32
  }
  func.func @transform_5(%arg0: i32) -> (i32, i32) {
    %c0_i32 = arith.constant 0 : i32
    %c0_i32_0 = arith.constant 0 : i32
    %c0_i32_1 = arith.constant 0 : i32
    return %c0_i32, %c0_i32_0 : i32, i32
  }
  func.func @transform_6(%arg0: i32) -> (i32, i32) {
    %c0_i32 = arith.constant 0 : i32
    %c0_i32_0 = arith.constant 0 : i32
    %c0_i32_1 = arith.constant 0 : i32
    return %c0_i32, %c0_i32_0 : i32, i32
  }
  func.func @transform_7(%arg0: i32) -> (i32, i32) {
    %c0_i32 = arith.constant 0 : i32
    %c0_i32_0 = arith.constant 0 : i32
    %c0_i32_1 = arith.constant 0 : i32
    return %c0_i32, %c0_i32_0 : i32, i32
  }
  func.func @transform_8(%arg0: i32) -> (i32, i32) {
    %c0_i32 = arith.constant 0 : i32
    %c0_i32_0 = arith.constant 0 : i32
    %c0_i32_1 = arith.constant 0 : i32
    return %c0_i32, %c0_i32_0 : i32, i32
  }
  func.func @transform_9(%arg0: i32) -> (i32, i32) {
    %c0_i32 = arith.constant 0 : i32
    %c0_i32_0 = arith.constant 0 : i32
    %c0_i32_1 = arith.constant 0 : i32
    return %c0_i32, %c0_i32_0 : i32, i32
  }
  func.func @transform_10(%arg0: i32) -> (i32, i32) {
    %c0_i32 = arith.constant 0 : i32
    %c0_i32_0 = arith.constant 0 : i32
    return %arg0, %c0_i32 : i32, i32
  }
  func.func @transform_11(%arg0: i32) -> (i32, i32) {
    %c0_i32 = arith.constant 0 : i32
    %c0_i32_0 = arith.constant 0 : i32
    return %arg0, %c0_i32 : i32, i32
  }
}

</mosaic_0001>

<llo_original>
// kernel: tpu_custom_call.1
$region0: #{tpu_custom_call.1}
  #allocation0 [shape = 'u32[]', space=smem, size = 0x4, offset = 0x4, fixed_abs, tag = 'smem constant byte address 0x4 - core index']
  #allocation1 [shape = 'u32[144,128]{1,0:T(1,128)}', space=vmem, size = 0x12000, scoped, tag = 'internal scratch']
  #allocation2 [shape = 'f32[32,512]{1,0:T(8,128)}', space=vmem, size = 0x10000, scoped, tag = 'scratch operand']
  #allocation3 [shape = 'f32[32,128]{1,0:T(8,128)}', space=vmem, size = 0x4000, scoped, tag = 'scratch operand']
  #allocation4 [shape = 'f32[8,128]{1,0:T(8,128)}', space=vmem, size = 0x1000, scoped, tag = 'scratch operand']
  #allocation5 [shape = 'f32[8,128]{1,0:T(8,128)}', space=vmem, size = 0x1000, scoped, tag = 'scratch operand']
  %s0 = inlined_call_operand.hbm [shape: f32[64,128], index: 0, kind: input, shape index: {}]
  %s1 = inlined_call_operand.hbm [shape: f32[8,128], index: 1, kind: input, shape index: {}]
  %s2 = inlined_call_operand.hbm [shape: f32[8,128], index: 2, kind: input, shape index: {}]
  %s3 = inlined_call_operand.hbm [shape: f32[128,128], index: 3, kind: input, shape index: {}]
  %s4 = inlined_call_operand.vmem [shape: f32[1,128], index: 4, kind: input, shape index: {}]
  %s5 = inlined_call_operand.hbm [shape: f32[128,512], index: 5, kind: input, shape index: {}]
  %s6 = inlined_call_operand.vmem [shape: f32[1,512], index: 6, kind: input, shape index: {}]
  %s7 = inlined_call_operand.hbm [shape: f32[128,512], index: 7, kind: input, shape index: {}]
  %s8 = inlined_call_operand.hbm [shape: f32[128,128], index: 8, kind: input, shape index: {}]
  %s9 = inlined_call_operand.vmem [shape: f32[1,128], index: 9, kind: input, shape index: {}]
  %s10 = inlined_call_operand.hbm [shape: f32[64,128], index: 10, kind: output, shape index: {0}]
  %s11 = inlined_call_operand.hbm [shape: f32[64,128], index: 11, kind: output, shape index: {1}]
  %12 = xla_tuple %s10, %s11
  %s13 = sld [smem:[#allocation0]]
  $region113: #{tpu_custom_call.1} parent=0
    _
  %s15 = ssub.s32 1, %s13
  %s16 = scalar_select 0, %s15, %s13
  $region1: #{tpu_custom_call.1} parent=0
    #allocation6 [shape = 'u8[32768]{0}', space=vmem, size = 0x8000, scoped, tag = 'input window, operand 0']
    #allocation7 [shape = 's32[2]{0}', space=sflag, size = 0x8, scoped, tag = 'scoped memory for tpu_custom_call.1']
    #allocation8 [shape = 's32[2]{0}', space=sflag, size = 0x8, scoped, tag = 'scoped memory for tpu_custom_call.1']
    #allocation9 [shape = 'u8[4096]{0}', space=vmem, size = 0x1000, scoped, tag = 'input window, operand 1, single buffered']
    #allocation10 [shape = 's32[1]{0}', space=sflag, size = 0x4, scoped, tag = 'scoped memory for tpu_custom_call.1']
    #allocation11 [shape = 'u8[4096]{0}', space=vmem, size = 0x1000, scoped, tag = 'input window, operand 2, single buffered']
    #allocation12 [shape = 'u8[65536]{0}', space=vmem, size = 0x10000, scoped, tag = 'input window, operand 3, single buffered']
    #allocation13 [shape = 's32[1]{0}', space=sflag, size = 0x4, scoped, tag = 'scoped memory for tpu_custom_call.1']
    #allocation14 [shape = 'u8[262144]{0}', space=vmem, size = 0x40000, scoped, tag = 'input window, operand 5, single buffered']
    #allocation15 [shape = 'u8[262144]{0}', space=vmem, size = 0x40000, scoped, tag = 'input window, operand 7, single buffered']
    #allocation16 [shape = 's32[1]{0}', space=sflag, size = 0x4, scoped, tag = 'scoped memory for tpu_custom_call.1']
    #allocation17 [shape = 'u8[65536]{0}', space=vmem, size = 0x10000, scoped, tag = 'input window, operand 8, single buffered']
    #allocation18 [shape = 'u8[32768]{0}', space=vmem, size = 0x8000, scoped, tag = 'output window, operand 0']
    #allocation19 [shape = 'u8[32768]{0}', space=vmem, size = 0x8000, scoped, tag = 'output window, operand 1']
    #allocation20 [shape = 's32[2]{0}', space=sflag, size = 0x8, scoped, tag = 'scoped memory for tpu_custom_call.1']
    %17 = vsyncpa [#allocation7], 0
    %s18 = scalar_lea.sflag [#allocation7], 1
    %19 = vsyncpa %s18, 0
    %20 = vsyncpa [#allocation10], 0
    %21 = vsyncpa [#allocation13], 0
    %22 = vsyncpa [#allocation16], 0
    %23 = vsyncpa [#allocation8], 0
    %s24 = scalar_lea.sflag [#allocation8], 1
    %25 = vsyncpa %s24, 0
    %26 = vsyncpa [#allocation20], 0
    %s27 = scalar_lea.sflag [#allocation20], 1
    %28 = vsyncpa %s27, 0
    loop: start=0, step=1, limit=4
    $region2: #{tpu_custom_call.1} parent=1 // loop_pre_header
      _
    $region3: #{tpu_custom_call.1} parent=1 // loop_header
      %s30 = sphi 0, %s34
      %p31 = scmp.ge.s32.totalorder %s30, 4
      %s40 = sphi 0, %s42
      %s43 = sphi 0, %s40
      %s44 = sphi 0, %s43
      %s60 = sphi 0, %s44
      %s64 = sphi 0, %s64
      %s66 = sphi 0, %s64
      %s67 = sphi 0, %s66
      %s81 = sphi 0, %s67
      %s85 = sphi 0, %s85
      %s87 = sphi 0, %s85
      %s88 = sphi 0, %s87
      %s102 = sphi 0, %s88
      %s106 = sphi 0, %s106
      %s108 = sphi 0, %s106
      %s109 = sphi 0, %s108
      %s123 = sphi 0, %s109
      %s127 = sphi 0, %s127
      %s129 = sphi 0, %s127
      %s130 = sphi 0, %s129
      %s144 = sphi 0, %s130
      %s148 = sphi 0, %s148
      %s150 = sphi 0, %s148
      %s151 = sphi 0, %s150
      %s165 = sphi 0, %s151
      %s169 = sphi 0, %s169
      %s171 = sphi 0, %s169
      %s172 = sphi 0, %s171
      %s186 = sphi 0, %s172
      %s190 = sphi 0, %s190
      %s192 = sphi 0, %s190
      %s193 = sphi 0, %s192
      %s207 = sphi 0, %s193
      %s211 = sphi 0, %s211
      %s213 = sphi 0, %s211
      %s214 = sphi 0, %s213
      %s228 = sphi 0, %s214
      %s232 = sphi 0, %s232
      %s234 = sphi 0, %s232
      %s235 = sphi 0, %s234
      %s249 = sphi 0, %s235
      %s255 = sphi 0, %s257
      %s258 = sphi 0, %s255
      %s259 = sphi 0, %s258
      %s275 = sphi 0, %s259
      %s281 = sphi 0, %s283
      %s284 = sphi 0, %s281
      %s285 = sphi 0, %s284
      %s301 = sphi 0, %s285
    $region4: #{tpu_custom_call.1} parent=1 // loop_header_branch
      %33 = sbr.rel (%p31) target = $region8
    $region5: #{tpu_custom_call.1} parent=1 // loop_body
      %s35 = ssub.s32 %s30, 1
      %s36 = ssub.s32 %s30, 2
      %s37 = sadd.s32 %s30, 1
      %s38 = ssub.s32 %s30, %s37
      %p39 = scmp.eq.s32.totalorder %s38, 0
      %s41 = sadd.s32 %s40, 1
      %s42 = scalar_select %p39, %s40, %s41
      %p45 = pneg %p39
      %p46 = scmp.eq.s32.totalorder %s30, 1
      %p47 = por %p45, %p46
      %p48 = scmp.ne.s32.totalorder %s40, %s43
      %p49 = scmp.eq.s32.totalorder %s30, 0
      %p50 = por %p48, %p49
      %p51 = scmp.ne.s32.totalorder %s40, %s43
      %p52 = scmp.eq.s32.totalorder %s35, 1
      %p53 = por %p51, %p52
      %p54 = scmp.ne.s32.totalorder %s43, %s44
      %p55 = scmp.eq.s32.totalorder %s35, 0
      %p56 = por %p54, %p55
      %p57 = scmp.ne.s32.totalorder %s43, %s44
      %p58 = scmp.eq.s32.totalorder %s36, 1
      %p59 = por %p57, %p58
      %p61 = scmp.ne.s32.totalorder %s44, %s60
      %p62 = scmp.eq.s32.totalorder %s36, 0
      %p63 = por %p61, %p62
      %s65 = sadd.s32 %s64, 1
      %p68 = scmp.eq.s32.totalorder %s30, 1
      %p69 = scmp.ne.s32.totalorder %s64, %s66
      %p70 = scmp.eq.s32.totalorder %s30, 0
      %p71 = por %p69, %p70
      %p72 = scmp.ne.s32.totalorder %s64, %s66
      %p73 = scmp.eq.s32.totalorder %s35, 1
      %p74 = por %p72, %p73
      %p75 = scmp.ne.s32.totalorder %s66, %s67
      %p76 = scmp.eq.s32.totalorder %s35, 0
      %p77 = por %p75, %p76
      %p78 = scmp.ne.s32.totalorder %s66, %s67
      %p79 = scmp.eq.s32.totalorder %s36, 1
      %p80 = por %p78, %p79
      %p82 = scmp.ne.s32.totalorder %s67, %s81
      %p83 = scmp.eq.s32.totalorder %s36, 0
      %p84 = por %p82, %p83
      %s86 = sadd.s32 %s85, 1
      %p89 = scmp.eq.s32.totalorder %s30, 1
      %p90 = scmp.ne.s32.totalorder %s85, %s87
      %p91 = scmp.eq.s32.totalorder %s30, 0
      %p92 = por %p90, %p91
      %p93 = scmp.ne.s32.totalorder %s85, %s87
      %p94 = scmp.eq.s32.totalorder %s35, 1
      %p95 = por %p93, %p94
      %p96 = scmp.ne.s32.totalorder %s87, %s88
      %p97 = scmp.eq.s32.totalorder %s35, 0
      %p98 = por %p96, %p97
      %p99 = scmp.ne.s32.totalorder %s87, %s88
      %p100 = scmp.eq.s32.totalorder %s36, 1
      %p101 = por %p99, %p100
      %p103 = scmp.ne.s32.totalorder %s88, %s102
      %p104 = scmp.eq.s32.totalorder %s36, 0
      %p105 = por %p103, %p104
      %s107 = sadd.s32 %s106, 1
      %p110 = scmp.eq.s32.totalorder %s30, 1
      %p111 = scmp.ne.s32.totalorder %s106, %s108
      %p112 = scmp.eq.s32.totalorder %s30, 0
      %p113 = por %p111, %p112
      %p114 = scmp.ne.s32.totalorder %s106, %s108
      %p115 = scmp.eq.s32.totalorder %s35, 1
      %p116 = por %p114, %p115
      %p117 = scmp.ne.s32.totalorder %s108, %s109
      %p118 = scmp.eq.s32.totalorder %s35, 0
      %p119 = por %p117, %p118
      %p120 = scmp.ne.s32.totalorder %s108, %s109
      %p121 = scmp.eq.s32.totalorder %s36, 1
      %p122 = por %p120, %p121
      %p124 = scmp.ne.s32.totalorder %s109, %s123
      %p125 = scmp.eq.s32.totalorder %s36, 0
      %p126 = por %p124, %p125
      %s128 = sadd.s32 %s127, 1
      %p131 = scmp.eq.s32.totalorder %s30, 1
      %p132 = scmp.ne.s32.totalorder %s127, %s129
      %p133 = scmp.eq.s32.totalorder %s30, 0
      %p134 = por %p132, %p133
      %p135 = scmp.ne.s32.totalorder %s127, %s129
      %p136 = scmp.eq.s32.totalorder %s35, 1
      %p137 = por %p135, %p136
      %p138 = scmp.ne.s32.totalorder %s129, %s130
      %p139 = scmp.eq.s32.totalorder %s35, 0
      %p140 = por %p138, %p139
      %p141 = scmp.ne.s32.totalorder %s129, %s130
      %p142 = scmp.eq.s32.totalorder %s36, 1
      %p143 = por %p141, %p142
      %p145 = scmp.ne.s32.totalorder %s130, %s144
      %p146 = scmp.eq.s32.totalorder %s36, 0
      %p147 = por %p145, %p146
      %s149 = sadd.s32 %s148, 1
      %p152 = scmp.eq.s32.totalorder %s30, 1
      %p153 = scmp.ne.s32.totalorder %s148, %s150
      %p154 = scmp.eq.s32.totalorder %s30, 0
      %p155 = por %p153, %p154
      %p156 = scmp.ne.s32.totalorder %s148, %s150
      %p157 = scmp.eq.s32.totalorder %s35, 1
      %p158 = por %p156, %p157
      %p159 = scmp.ne.s32.totalorder %s150, %s151
      %p160 = scmp.eq.s32.totalorder %s35, 0
      %p161 = por %p159, %p160
      %p162 = scmp.ne.s32.totalorder %s150, %s151
      %p163 = scmp.eq.s32.totalorder %s36, 1
      %p164 = por %p162, %p163
      %p166 = scmp.ne.s32.totalorder %s151, %s165
      %p167 = scmp.eq.s32.totalorder %s36, 0
      %p168 = por %p166, %p167
      %s170 = sadd.s32 %s169, 1
      %p173 = scmp.eq.s32.totalorder %s30, 1
      %p174 = scmp.ne.s32.totalorder %s169, %s171
      %p175 = scmp.eq.s32.totalorder %s30, 0
      %p176 = por %p174, %p175
      %p177 = scmp.ne.s32.totalorder %s169, %s171
      %p178 = scmp.eq.s32.totalorder %s35, 1
      %p179 = por %p177, %p178
      %p180 = scmp.ne.s32.totalorder %s171, %s172
      %p181 = scmp.eq.s32.totalorder %s35, 0
      %p182 = por %p180, %p181
      %p183 = scmp.ne.s32.totalorder %s171, %s172
      %p184 = scmp.eq.s32.totalorder %s36, 1
      %p185 = por %p183, %p184
      %p187 = scmp.ne.s32.totalorder %s172, %s186
      %p188 = scmp.eq.s32.totalorder %s36, 0
      %p189 = por %p187, %p188
      %s191 = sadd.s32 %s190, 1
      %p194 = scmp.eq.s32.totalorder %s30, 1
      %p195 = scmp.ne.s32.totalorder %s190, %s192
      %p196 = scmp.eq.s32.totalorder %s30, 0
      %p197 = por %p195, %p196
      %p198 = scmp.ne.s32.totalorder %s190, %s192
      %p199 = scmp.eq.s32.totalorder %s35, 1
      %p200 = por %p198, %p199
      %p201 = scmp.ne.s32.totalorder %s192, %s193
      %p202 = scmp.eq.s32.totalorder %s35, 0
      %p203 = por %p201, %p202
      %p204 = scmp.ne.s32.totalorder %s192, %s193
      %p205 = scmp.eq.s32.totalorder %s36, 1
      %p206 = por %p204, %p205
      %p208 = scmp.ne.s32.totalorder %s193, %s207
      %p209 = scmp.eq.s32.totalorder %s36, 0
      %p210 = por %p208, %p209
      %s212 = sadd.s32 %s211, 1
      %p215 = scmp.eq.s32.totalorder %s30, 1
      %p216 = scmp.ne.s32.totalorder %s211, %s213
      %p217 = scmp.eq.s32.totalorder %s30, 0
      %p218 = por %p216, %p217
      %p219 = scmp.ne.s32.totalorder %s211, %s213
      %p220 = scmp.eq.s32.totalorder %s35, 1
      %p221 = por %p219, %p220
      %p222 = scmp.ne.s32.totalorder %s213, %s214
      %p223 = scmp.eq.s32.totalorder %s35, 0
      %p224 = por %p222, %p223
      %p225 = scmp.ne.s32.totalorder %s213, %s214
      %p226 = scmp.eq.s32.totalorder %s36, 1
      %p227 = por %p225, %p226
      %p229 = scmp.ne.s32.totalorder %s214, %s228
      %p230 = scmp.eq.s32.totalorder %s36, 0
      %p231 = por %p229, %p230
      %s233 = sadd.s32 %s232, 1
      %p236 = scmp.eq.s32.totalorder %s30, 1
      %p237 = scmp.ne.s32.totalorder %s232, %s234
      %p238 = scmp.eq.s32.totalorder %s30, 0
      %p239 = por %p237, %p238
      %p240 = scmp.ne.s32.totalorder %s232, %s234
      %p241 = scmp.eq.s32.totalorder %s35, 1
      %p242 = por %p240, %p241
      %p243 = scmp.ne.s32.totalorder %s234, %s235
      %p244 = scmp.eq.s32.totalorder %s35, 0
      %p245 = por %p243, %p244
      %p246 = scmp.ne.s32.totalorder %s234, %s235
      %p247 = scmp.eq.s32.totalorder %s36, 1
      %p248 = por %p246, %p247
      %p250 = scmp.ne.s32.totalorder %s235, %s249
      %p251 = scmp.eq.s32.totalorder %s36, 0
      %p252 = por %p250, %p251
      %s253 = ssub.s32 %s30, %s37
      %p254 = scmp.eq.s32.totalorder %s253, 0
      %s256 = sadd.s32 %s255, 1
      %s257 = scalar_select %p254, %s255, %s256
      %p260 = pneg %p254
      %p261 = scmp.eq.s32.totalorder %s30, 1
      %p262 = por %p260, %p261
      %p263 = scmp.ne.s32.totalorder %s255, %s258
      %p264 = scmp.eq.s32.totalorder %s30, 0
      %p265 = por %p263, %p264
      %p266 = scmp.ne.s32.totalorder %s255, %s258
      %p267 = scmp.eq.s32.totalorder %s35, 1
      %p268 = por %p266, %p267
      %p269 = scmp.ne.s32.totalorder %s258, %s259
      %p270 = scmp.eq.s32.totalorder %s35, 0
      %p271 = por %p269, %p270
      %p272 = scmp.ne.s32.totalorder %s258, %s259
      %p273 = scmp.eq.s32.totalorder %s36, 1
      %p274 = por %p272, %p273
      %p276 = scmp.ne.s32.totalorder %s259, %s275
      %p277 = scmp.eq.s32.totalorder %s36, 0
      %p278 = por %p276, %p277
      %s279 = ssub.s32 %s30, %s37
      %p280 = scmp.eq.s32.totalorder %s279, 0
      %s282 = sadd.s32 %s281, 1
      %s283 = scalar_select %p280, %s281, %s282
      %p286 = pneg %p280
      %p287 = scmp.eq.s32.totalorder %s30, 1
      %p288 = por %p286, %p287
      %p289 = scmp.ne.s32.totalorder %s281, %s284
      %p290 = scmp.eq.s32.totalorder %s30, 0
      %p291 = por %p289, %p290
      %p292 = scmp.ne.s32.totalorder %s281, %s284
      %p293 = scmp.eq.s32.totalorder %s35, 1
      %p294 = por %p292, %p293
      %p295 = scmp.ne.s32.totalorder %s284, %s285
      %p296 = scmp.eq.s32.totalorder %s35, 0
      %p297 = por %p295, %p296
      %p298 = scmp.ne.s32.totalorder %s284, %s285
      %p299 = scmp.eq.s32.totalorder %s36, 1
      %p300 = por %p298, %p299
      %p302 = scmp.ne.s32.totalorder %s285, %s301
      %p303 = scmp.eq.s32.totalorder %s36, 0
      %p304 = por %p302, %p303
      %p305 = scmp.le.s32.totalorder 1, %s30
      %p306 = scmp.lt.s32.totalorder %s30, 3
      %p307 = pnand %p305, %p306
      %p308 = pneg %p307
      // Predicated region
      $region9: #{tpu_custom_call.1} parent=5 // pred_check
        _
      $region10: #{tpu_custom_call.1} parent=5 // pred_check_branch
        %310 = sbr.rel (%p307) target = $region12
      $region11: #{tpu_custom_call.1} parent=5 // pred_region
        %s311 = ssub.s32 %s30, 1
        // Predicated region
        $region13: #{tpu_custom_call.1} parent=11 // pred_check
          %p312 = pneg %p77
        $region14: #{tpu_custom_call.1} parent=11 // pred_check_branch
          %314 = sbr.rel (%p312) target = $region16
        $region15: #{tpu_custom_call.1} parent=11 // pred_region
          %s316 = ssub.s32 128, 128
          %317 = vsyncadd [#allocation10], %s316
          %s319 = sshll.u32 [#allocation9], 4
          %s320 = int_to_ptr.vmem [resolvable:$true] %s319
          %322 = dma.hbm_to_vmem [thread:$0]  %s1, 128, %s320, [#allocation10]
        $region16: #{tpu_custom_call.1} parent=11 // pred_fallthru
          _
        // Predicated region
        $region17: #{tpu_custom_call.1} parent=11 // pred_check
          %p323 = pneg %p98
        $region18: #{tpu_custom_call.1} parent=11 // pred_check_branch
          %325 = sbr.rel (%p323) target = $region20
        $region19: #{tpu_custom_call.1} parent=11 // pred_region
          %s327 = ssub.s32 128, 128
          %328 = vsyncadd [#allocation10], %s327
          %s330 = sshll.u32 [#allocation11], 4
          %s331 = int_to_ptr.vmem [resolvable:$true] %s330
          %333 = dma.hbm_to_vmem [thread:$0]  %s2, 128, %s331, [#allocation10]
        $region20: #{tpu_custom_call.1} parent=11 // pred_fallthru
          _
        // Predicated region
        $region21: #{tpu_custom_call.1} parent=11 // pred_check
          %p334 = pneg %p119
        $region22: #{tpu_custom_call.1} parent=11 // pred_check_branch
          %336 = sbr.rel (%p334) target = $region24
        $region23: #{tpu_custom_call.1} parent=11 // pred_region
          %s338 = ssub.s32 2048, 2048
          %339 = vsyncadd [#allocation13], %s338
          %s340 = sshll.u32 [#allocation12], 4
          %s341 = int_to_ptr.vmem [resolvable:$true] %s340
          %346 = dma.hbm_to_vmem [thread:$0]  %s3, 2048, %s341, [#allocation13], 128, 128, 8
        $region24: #{tpu_custom_call.1} parent=11 // pred_fallthru
          _
        // Predicated region
        $region25: #{tpu_custom_call.1} parent=11 // pred_check
          %p347 = pneg %p140
        $region26: #{tpu_custom_call.1} parent=11 // pred_check_branch
          %349 = sbr.rel (%p347) target = $region28
        $region27: #{tpu_custom_call.1} parent=11 // pred_region
          _
        $region28: #{tpu_custom_call.1} parent=11 // pred_fallthru
          _
        // Predicated region
        $region29: #{tpu_custom_call.1} parent=11 // pred_check
          %p350 = pneg %p161
        $region30: #{tpu_custom_call.1} parent=11 // pred_check_branch
          %352 = sbr.rel (%p350) target = $region32
        $region31: #{tpu_custom_call.1} parent=11 // pred_region
          %s354 = ssub.s32 8192, 8192
          %355 = vsyncadd [#allocation13], %s354
          %s356 = sshll.u32 [#allocation14], 4
          %s357 = int_to_ptr.vmem [resolvable:$true] %s356
          %362 = dma.hbm_to_vmem [thread:$0]  %s5, 8192, %s357, [#allocation13], 512, 512, 32
        $region32: #{tpu_custom_call.1} parent=11 // pred_fallthru
          _
        // Predicated region
        $region33: #{tpu_custom_call.1} parent=11 // pred_check
          %p363 = pneg %p182
        $region34: #{tpu_custom_call.1} parent=11 // pred_check_branch
          %365 = sbr.rel (%p363) target = $region36
        $region35: #{tpu_custom_call.1} parent=11 // pred_region
          _
        $region36: #{tpu_custom_call.1} parent=11 // pred_fallthru
          _
        // Predicated region
        $region37: #{tpu_custom_call.1} parent=11 // pred_check
          %p366 = pneg %p203
        $region38: #{tpu_custom_call.1} parent=11 // pred_check_branch
          %368 = sbr.rel (%p366) target = $region40
        $region39: #{tpu_custom_call.1} parent=11 // pred_region
          %s370 = ssub.s32 8192, 8192
          %371 = vsyncadd [#allocation16], %s370
          %s372 = sshll.u32 [#allocation15], 4
          %s373 = int_to_ptr.vmem [resolvable:$true] %s372
          %378 = dma.hbm_to_vmem [thread:$0]  %s7, 8192, %s373, [#allocation16], 512, 512, 32
        $region40: #{tpu_custom_call.1} parent=11 // pred_fallthru
          _
        // Predicated region
        $region41: #{tpu_custom_call.1} parent=11 // pred_check
          %p379 = pneg %p224
        $region42: #{tpu_custom_call.1} parent=11 // pred_check_branch
          %381 = sbr.rel (%p379) target = $region44
        $region43: #{tpu_custom_call.1} parent=11 // pred_region
          %s383 = ssub.s32 2048, 2048
          %384 = vsyncadd [#allocation16], %s383
          %s385 = sshll.u32 [#allocation17], 4
          %s386 = int_to_ptr.vmem [resolvable:$true] %s385
          %391 = dma.hbm_to_vmem [thread:$0]  %s8, 2048, %s386, [#allocation16], 128, 128, 8
        $region44: #{tpu_custom_call.1} parent=11 // pred_fallthru
          _
        // Predicated region
        $region45: #{tpu_custom_call.1} parent=11 // pred_check
          %p392 = pneg %p245
        $region46: #{tpu_custom_call.1} parent=11 // pred_check_branch
          %394 = sbr.rel (%p392) target = $region48
        $region47: #{tpu_custom_call.1} parent=11 // pred_region
          _
        $region48: #{tpu_custom_call.1} parent=11 // pred_fallthru
          _
      $region12: #{tpu_custom_call.1} parent=5 // pred_fallthru
        _
      %p395 = scmp.lt.s32.totalorder %s30, 2
      // Predicated region
      $region49: #{tpu_custom_call.1} parent=5 // pred_check
        %p396 = pneg %p395
      $region50: #{tpu_custom_call.1} parent=5 // pred_check_branch
        %398 = sbr.rel (%p396) target = $region52
      $region51: #{tpu_custom_call.1} parent=5 // pred_region
        // Predicated region
        $region53: #{tpu_custom_call.1} parent=51 // pred_check
          %p399 = pneg %p50
        $region54: #{tpu_custom_call.1} parent=51 // pred_check_branch
          %401 = sbr.rel (%p399) target = $region56
        $region55: #{tpu_custom_call.1} parent=51 // pred_region
          %s402 = sand.u32 %s40, 1
          %s403 = scalar_lea.sflag [#allocation7], %s402
          %s404 = sand.u32 %s40, 1
          %s405 = smul.addr %s404, 32
          %s406 = scalar_lea.vmem [#allocation6], %s405
          %s407 = smul.u32 4, %s30
          %s409 = ssub.s32 512, 512
          %410 = vsyncadd %s403, %s409
          %s411 = smul.addr %s407, 128
          %s412 = scalar_lea.hbm %s0, %s411
          %s413 = sshll.u32 %s406, 4
          %s414 = int_to_ptr.vmem [resolvable:$true] %s413
          %419 = dma.hbm_to_vmem [thread:$0]  %s412, 512, %s414, %s403, 128, 128, 8
        $region56: #{tpu_custom_call.1} parent=51 // pred_fallthru
          _
      $region52: #{tpu_custom_call.1} parent=5 // pred_fallthru
        _
      %p420 = scmp.le.s32.totalorder 1, %s30
      %p421 = scmp.lt.s32.totalorder %s30, 3
      %p422 = pnand %p420, %p421
      %p423 = pneg %p422
      // Predicated region
      $region57: #{tpu_custom_call.1} parent=5 // pred_check
        _
      $region58: #{tpu_custom_call.1} parent=5 // pred_check_branch
        %425 = sbr.rel (%p422) target = $region60
      $region59: #{tpu_custom_call.1} parent=5 // pred_region
        %s426 = ssub.s32 %s30, 1
        %s427 = sand.u32 %s43, 1
        %s428 = scalar_lea.sflag [#allocation7], %s427
        %s429 = sand.u32 %s43, 1
        %s430 = smul.addr %s429, 32
        %s431 = scalar_lea.vmem [#allocation6], %s430
        // Predicated region
        $region61: #{tpu_custom_call.1} parent=59 // pred_check
          %p432 = pneg %p56
        $region62: #{tpu_custom_call.1} parent=59 // pred_check_branch
          %434 = sbr.rel (%p432) target = $region64
        $region63: #{tpu_custom_call.1} parent=59 // pred_region
          %435 = dma.done %s428, 512
        $region64: #{tpu_custom_call.1} parent=59 // pred_fallthru
          _
        // Predicated region
        $region65: #{tpu_custom_call.1} parent=59 // pred_check
          %p436 = pneg %p77
        $region66: #{tpu_custom_call.1} parent=59 // pred_check_branch
          %438 = sbr.rel (%p436) target = $region68
        $region67: #{tpu_custom_call.1} parent=59 // pred_region
          %439 = dma.done [#allocation10], 128
        $region68: #{tpu_custom_call.1} parent=59 // pred_fallthru
          _
        // Predicated region
        $region69: #{tpu_custom_call.1} parent=59 // pred_check
          %p440 = pneg %p98
        $region70: #{tpu_custom_call.1} parent=59 // pred_check_branch
          %442 = sbr.rel (%p440) target = $region72
        $region71: #{tpu_custom_call.1} parent=59 // pred_region
          %443 = dma.done [#allocation10], 128
        $region72: #{tpu_custom_call.1} parent=59 // pred_fallthru
          _
        // Predicated region
        $region73: #{tpu_custom_call.1} parent=59 // pred_check
          %p444 = pneg %p119
        $region74: #{tpu_custom_call.1} parent=59 // pred_check_branch
          %446 = sbr.rel (%p444) target = $region76
        $region75: #{tpu_custom_call.1} parent=59 // pred_region
          %447 = dma.done [#allocation13], 2048
        $region76: #{tpu_custom_call.1} parent=59 // pred_fallthru
          _
        // Predicated region
        $region77: #{tpu_custom_call.1} parent=59 // pred_check
          %p448 = pneg %p161
        $region78: #{tpu_custom_call.1} parent=59 // pred_check_branch
          %450 = sbr.rel (%p448) target = $region80
        $region79: #{tpu_custom_call.1} parent=59 // pred_region
          %451 = dma.done [#allocation13], 8192
        $region80: #{tpu_custom_call.1} parent=59 // pred_fallthru
          _
        // Predicated region
        $region81: #{tpu_custom_call.1} parent=59 // pred_check
          %p452 = pneg %p203
        $region82: #{tpu_custom_call.1} parent=59 // pred_check_branch
          %454 = sbr.rel (%p452) target = $region84
        $region83: #{tpu_custom_call.1} parent=59 // pred_region
          %455 = dma.done [#allocation16], 8192
        $region84: #{tpu_custom_call.1} parent=59 // pred_fallthru
          _
        // Predicated region
        $region85: #{tpu_custom_call.1} parent=59 // pred_check
          %p456 = pneg %p224
        $region86: #{tpu_custom_call.1} parent=59 // pred_check_branch
          %458 = sbr.rel (%p456) target = $region88
        $region87: #{tpu_custom_call.1} parent=59 // pred_region
          %459 = dma.done [#allocation16], 2048
        $region88: #{tpu_custom_call.1} parent=59 // pred_fallthru
          _
        %s460 = sand.u32 %s43, 1
        %s461 = scalar_lea.sflag [#allocation7], %s460
        %s462 = sand.u32 %s43, 1
        %s463 = smul.addr %s462, 32
        %s464 = scalar_lea.vmem [#allocation6], %s463
        %p465 = pneg %p56
        %p466 = pneg %p53
        %p467 = pneg %p77
        %p468 = pneg %p74
        %p469 = pneg %p98
        %p470 = pneg %p95
        %p471 = pneg %p119
        %p472 = pneg %p116
        %p473 = pneg %p140
        %p474 = pneg %p137
        %p475 = pneg %p161
        %p476 = pneg %p158
        %p477 = pneg %p182
        %p478 = pneg %p179
        %p479 = pneg %p203
        %p480 = pneg %p200
        %p481 = pneg %p224
        %p482 = pneg %p221
        %p483 = pneg %p245
        %p484 = pneg %p242
        %p485 = pneg %p271
        %p486 = pneg %p268
        %s487 = sand.u32 %s258, 1
        %s488 = scalar_lea.sflag [#allocation8], %s487
        %s489 = sand.u32 %s258, 1
        %s490 = smul.addr %s489, 32
        %s491 = scalar_lea.vmem [#allocation18], %s490
        %p492 = pneg %p297
        %p493 = pneg %p294
        %s494 = sand.u32 %s284, 1
        %s495 = scalar_lea.sflag [#allocation20], %s494
        %s496 = sand.u32 %s284, 1
        %s497 = smul.addr %s496, 32
        %s498 = scalar_lea.vmem [#allocation19], %s497
        %s499 = smul.u32 4, %s35
        %s500 = smul.u32 4, %s35
        %s501 = smul.u32 4, %s35
        %p502 = scmp.eq.s32.totalorder %s35, 0
        // Predicated region
        $region89: #{tpu_custom_call.1} parent=59 // pred_check
          %p503 = pneg %p502
        $region90: #{tpu_custom_call.1} parent=59 // pred_check_branch
          %505 = sbr.rel (%p503) target = $region92
        $region91: #{tpu_custom_call.1} parent=59 // pred_region
          %v506 = vld [vmem:[#allocation9] sm:$0xff]
          %507 = vst [vmem:[#allocation4] sm:$0xff] %v506
          %v508 = vld [vmem:[#allocation11] sm:$0xff]
          %509 = vst [vmem:[#allocation5] sm:$0xff] %v508
        $region92: #{tpu_custom_call.1} parent=59 // pred_fallthru
          _
        %v510 = vld [vmem:[%s431] sm:$0xff]
        %v511 = vld [vmem:[%s431 + $0x8] sm:$0xff]
        %v512 = vld [vmem:[%s431 + $0x10] sm:$0xff]
        %v513 = vld [vmem:[%s431 + $0x18] sm:$0xff]
        %v514 = vld [vmem:[#allocation12] sm:$0xff]
        %v515 = vld [vmem:[#allocation12 + $0x8] sm:$0xff]
        %v516 = vld [vmem:[#allocation12 + $0x10] sm:$0xff]
        %v517 = vld [vmem:[#allocation12 + $0x18] sm:$0xff]
        %v518 = vld [vmem:[#allocation12 + $0x20] sm:$0xff]
        %v519 = vld [vmem:[#allocation12 + $0x28] sm:$0xff]
        %v520 = vld [vmem:[#allocation12 + $0x30] sm:$0xff]
        %v521 = vld [vmem:[#allocation12 + $0x38] sm:$0xff]
        %v522 = vld [vmem:[#allocation12 + $0x40] sm:$0xff]
        %v523 = vld [vmem:[#allocation12 + $0x48] sm:$0xff]
        %v524 = vld [vmem:[#allocation12 + $0x50] sm:$0xff]
        %v525 = vld [vmem:[#allocation12 + $0x58] sm:$0xff]
        %v526 = vld [vmem:[#allocation12 + $0x60] sm:$0xff]
        %v527 = vld [vmem:[#allocation12 + $0x68] sm:$0xff]
        %v528 = vld [vmem:[#allocation12 + $0x70] sm:$0xff]
        %v529 = vld [vmem:[#allocation12 + $0x78] sm:$0xff]
        %v530 = vld [vmem:[%s4] sm:$0x1]
        %v532 = vlaneseq
        %v533 = vshrl.u32 %v532, 7
        %v534 = vsub.s32 0, %v533
        %v535 = vrot.slane %v530, %v534
        %537 = vmatprep.subr.mxu0 0.0
        %538 = vmatpush1.msra.mxu0 %v514
        %539 = vmatprep.subr.mxu0 0.0
        %540 = vmatpush1.msra.mxu0 %v515
        %541 = vmatprep.subr.mxu0 0.0
        %542 = vmatpush1.msra.mxu0 %v516
        %543 = vmatprep.subr.mxu0 0.0
        %544 = vmatpush1.msra.mxu0 %v517
        %545 = vmatprep.subr.mxu0 0.0
        %546 = vmatpush1.msra.mxu0 %v518
        %547 = vmatprep.subr.mxu0 0.0
        %548 = vmatpush1.msra.mxu0 %v519
        %549 = vmatprep.subr.mxu0 0.0
        %550 = vmatpush1.msra.mxu0 %v520
        %551 = vmatprep.subr.mxu0 0.0
        %552 = vmatpush1.msra.mxu0 %v521
        %553 = vmatprep.subr.mxu0 0.0
        %554 = vmatpush1.msra.mxu0 %v522
        %555 = vmatprep.subr.mxu0 0.0
        %556 = vmatpush1.msra.mxu0 %v523
        %557 = vmatprep.subr.mxu0 0.0
        %558 = vmatpush1.msra.mxu0 %v524
        %559 = vmatprep.subr.mxu0 0.0
        %560 = vmatpush1.msra.mxu0 %v525
        %561 = vmatprep.subr.mxu0 0.0
        %562 = vmatpush1.msra.mxu0 %v526
        %563 = vmatprep.subr.mxu0 0.0
        %564 = vmatpush1.msra.mxu0 %v527
        %565 = vmatprep.subr.mxu0 0.0
        %566 = vmatpush1.msra.mxu0 %v528
        %567 = vmatprep.subr.mxu0 0.0
        %568 = vmatpush1.msra.mxu0 %v529
        %569 = vmatprep.subr.mxu0 0.0
        %570 = vmatpush1.msra.mxu0 0.0
        %571 = vmatprep.subr.mxu0 0.0
        %572 = vmatpush1.msra.mxu0 0.0
        %573 = vmatprep.subr.mxu0 0.0
        %574 = vmatpush1.msra.mxu0 0.0
        %575 = vmatprep.subr.mxu0 0.0
        %576 = vmatpush1.msra.mxu0 0.0
        %577 = vmatprep.subr.mxu0 0.0
        %578 = vmatpush1.msra.mxu0 0.0
        %579 = vmatprep.subr.mxu0 0.0
        %580 = vmatpush1.msra.mxu0 0.0
        %581 = vmatprep.subr.mxu0 0.0
        %582 = vmatpush1.msra.mxu0 0.0
        %583 = vmatprep.subr.mxu0 0.0
        %584 = vmatpush1.msra.mxu0 0.0
        %585 = vmatprep.subr.mxu0 0.0
        %586 = vmatpush1.msra.mxu0 0.0
        %587 = vmatprep.subr.mxu0 0.0
        %588 = vmatpush1.msra.mxu0 0.0
        %589 = vmatprep.subr.mxu0 0.0
        %590 = vmatpush1.msra.mxu0 0.0
        %591 = vmatprep.subr.mxu0 0.0
        %592 = vmatpush1.msra.mxu0 0.0
        %593 = vmatprep.subr.mxu0 0.0
        %594 = vmatpush1.msra.mxu0 0.0
        %595 = vmatprep.subr.mxu0 0.0
        %596 = vmatpush1.msra.mxu0 0.0
        %597 = vmatprep.subr.mxu0 0.0
        %598 = vmatpush1.msra.mxu0 0.0
        %599 = vmatprep.subr.mxu0 0.0
        %600 = vmatpush1.msra.mxu0 0.0
        %601 = vmatprep.mubr.f32.mxu0 0.0
        %602 = vmatmul.mubr.f32.gmra.mrb[0].mxu0 %v510
        %v603 = vpop.f32.mrb[0].mxu0
        %v604 = vadd.f32 %v535, %v603
        %v605 = vpop.f32.mrb[0].mxu0
        %606 = vmatprep.mubr.f32.mxu0 0.0
        %607 = vmatmul.mubr.f32.gmra.mrb[0].mxu0 %v511
        %v608 = vpop.f32.mrb[0].mxu0
        %v609 = vadd.f32 %v535, %v608
        %v610 = vpop.f32.mrb[0].mxu0
        %611 = vmatprep.mubr.f32.mxu0 0.0
        %612 = vmatmul.mubr.f32.gmra.mrb[0].mxu0 %v512
        %v613 = vpop.f32.mrb[0].mxu0
        %v614 = vadd.f32 %v535, %v613
        %v615 = vpop.f32.mrb[0].mxu0
        %616 = vmatprep.mubr.f32.mxu0 0.0
        %617 = vmatmul.mubr.f32.gmra.mrb[0].mxu0 %v513
        %v618 = vpop.f32.mrb[0].mxu0
        %v619 = vadd.f32 %v535, %v618
        %v620 = vpop.f32.mrb[0].mxu0
        %621 = vdwg.mxu0
        %v622 = vmax.f32 %v604, 0.0
        %v623 = vmax.f32 %v609, 0.0
        %v624 = vmax.f32 %v614, 0.0
        %v625 = vmax.f32 %v619, 0.0
        %v626 = vld [vmem:[#allocation14] sm:$0xff]
        %v627 = vld [vmem:[#allocation14 + $0x8] sm:$0xff]
        %v628 = vld [vmem:[#allocation14 + $0x10] sm:$0xff]
        %v629 = vld [vmem:[#allocation14 + $0x18] sm:$0xff]
        %v630 = vld [vmem:[#allocation14 + $0x20] sm:$0xff]
        %v631 = vld [vmem:[#allocation14 + $0x28] sm:$0xff]
        %v632 = vld [vmem:[#allocation14 + $0x30] sm:$0xff]
        %v633 = vld [vmem:[#allocation14 + $0x38] sm:$0xff]
        %v634 = vld [vmem:[#allocation14 + $0x40] sm:$0xff]
        %v635 = vld [vmem:[#allocation14 + $0x48] sm:$0xff]
        %v636 = vld [vmem:[#allocation14 + $0x50] sm:$0xff]
        %v637 = vld [vmem:[#allocation14 + $0x58] sm:$0xff]
        %v638 = vld [vmem:[#allocation14 + $0x60] sm:$0xff]
        %v639 = vld [vmem:[#allocation14 + $0x68] sm:$0xff]
        %v640 = vld [vmem:[#allocation14 + $0x70] sm:$0xff]
        %v641 = vld [vmem:[#allocation14 + $0x78] sm:$0xff]
        %v642 = vld [vmem:[#allocation14 + $0x80] sm:$0xff]
        %v643 = vld [vmem:[#allocation14 + $0x88] sm:$0xff]
        %v644 = vld [vmem:[#allocation14 + $0x90] sm:$0xff]
        %v645 = vld [vmem:[#allocation14 + $0x98] sm:$0xff]
        %v646 = vld [vmem:[#allocation14 + $0xa0] sm:$0xff]
        %v647 = vld [vmem:[#allocation14 + $0xa8] sm:$0xff]
        %v648 = vld [vmem:[#allocation14 + $0xb0] sm:$0xff]
        %v649 = vld [vmem:[#allocation14 + $0xb8] sm:$0xff]
        %v650 = vld [vmem:[#allocation14 + $0xc0] sm:$0xff]
        %v651 = vld [vmem:[#allocation14 + $0xc8] sm:$0xff]
        %v652 = vld [vmem:[#allocation14 + $0xd0] sm:$0xff]
        %v653 = vld [vmem:[#allocation14 + $0xd8] sm:$0xff]
        %v654 = vld [vmem:[#allocation14 + $0xe0] sm:$0xff]
        %v655 = vld [vmem:[#allocation14 + $0xe8] sm:$0xff]
        %v656 = vld [vmem:[#allocation14 + $0xf0] sm:$0xff]
        %v657 = vld [vmem:[#allocation14 + $0xf8] sm:$0xff]
        %v658 = vld [vmem:[#allocation14 + $0x100] sm:$0xff]
        %v659 = vld [vmem:[#allocation14 + $0x108] sm:$0xff]
        %v660 = vld [vmem:[#allocation14 + $0x110] sm:$0xff]
        %v661 = vld [vmem:[#allocation14 + $0x118] sm:$0xff]
        %v662 = vld [vmem:[#allocation14 + $0x120] sm:$0xff]
        %v663 = vld [vmem:[#allocation14 + $0x128] sm:$0xff]
        %v664 = vld [vmem:[#allocation14 + $0x130] sm:$0xff]
        %v665 = vld [vmem:[#allocation14 + $0x138] sm:$0xff]
        %v666 = vld [vmem:[#allocation14 + $0x140] sm:$0xff]
        %v667 = vld [vmem:[#allocation14 + $0x148] sm:$0xff]
        %v668 = vld [vmem:[#allocation14 + $0x150] sm:$0xff]
        %v669 = vld [vmem:[#allocation14 + $0x158] sm:$0xff]
        %v670 = vld [vmem:[#allocation14 + $0x160] sm:$0xff]
        %v671 = vld [vmem:[#allocation14 + $0x168] sm:$0xff]
        %v672 = vld [vmem:[#allocation14 + $0x170] sm:$0xff]
        %v673 = vld [vmem:[#allocation14 + $0x178] sm:$0xff]
        %v674 = vld [vmem:[#allocation14 + $0x180] sm:$0xff]
        %v675 = vld [vmem:[#allocation14 + $0x188] sm:$0xff]
        %v676 = vld [vmem:[#allocation14 + $0x190] sm:$0xff]
        %v677 = vld [vmem:[#allocation14 + $0x198] sm:$0xff]
        %v678 = vld [vmem:[#allocation14 + $0x1a0] sm:$0xff]
        %v679 = vld [vmem:[#allocation14 + $0x1a8] sm:$0xff]
        %v680 = vld [vmem:[#allocation14 + $0x1b0] sm:$0xff]
        %v681 = vld [vmem:[#allocation14 + $0x1b8] sm:$0xff]
        %v682 = vld [vmem:[#allocation14 + $0x1c0] sm:$0xff]
        %v683 = vld [vmem:[#allocation14 + $0x1c8] sm:$0xff]
        %v684 = vld [vmem:[#allocation14 + $0x1d0] sm:$0xff]
        %v685 = vld [vmem:[#allocation14 + $0x1d8] sm:$0xff]
        %v686 = vld [vmem:[#allocation14 + $0x1e0] sm:$0xff]
        %v687 = vld [vmem:[#allocation14 + $0x1e8] sm:$0xff]
        %v688 = vld [vmem:[#allocation14 + $0x1f0] sm:$0xff]
        %v689 = vld [vmem:[#allocation14 + $0x1f8] sm:$0xff]
        %v690 = vld [vmem:[%s6] sm:$0xf]
        %v692 = vlaneseq
        %v693 = vshrl.u32 %v692, 7
        %v694 = vsub.s32 0, %v693
        %v695 = vrot.slane %v690, %v694
        %v696 = vlaneseq
        %v697 = vshrl.u32 %v696, 7
        %v698 = vsub.s32 1, %v697
        %v699 = vrot.slane %v690, %v698
        %v700 = vlaneseq
        %v701 = vshrl.u32 %v700, 7
        %v702 = vsub.s32 2, %v701
        %v703 = vrot.slane %v690, %v702
        %v704 = vlaneseq
        %v705 = vshrl.u32 %v704, 7
        %v706 = vsub.s32 3, %v705
        %v707 = vrot.slane %v690, %v706
        %712 = vmatprep.subr.mxu0 %v627
        %713 = vmatpush1.msra.mxu0 %v626
        %714 = vmatprep.subr.mxu0 %v631
        %715 = vmatpush1.msra.mxu0 %v630
        %716 = vmatprep.subr.mxu0 %v635
        %717 = vmatpush1.msra.mxu0 %v634
        %718 = vmatprep.subr.mxu0 %v639
        %719 = vmatpush1.msra.mxu0 %v638
        %720 = vmatprep.subr.mxu0 %v643
        %721 = vmatpush1.msra.mxu0 %v642
        %722 = vmatprep.subr.mxu0 %v647
        %723 = vmatpush1.msra.mxu0 %v646
        %724 = vmatprep.subr.mxu0 %v651
        %725 = vmatpush1.msra.mxu0 %v650
        %726 = vmatprep.subr.mxu0 %v655
        %727 = vmatpush1.msra.mxu0 %v654
        %728 = vmatprep.subr.mxu0 %v659
        %729 = vmatpush1.msra.mxu0 %v658
        %730 = vmatprep.subr.mxu0 %v663
        %731 = vmatpush1.msra.mxu0 %v662
        %732 = vmatprep.subr.mxu0 %v667
        %733 = vmatpush1.msra.mxu0 %v666
        %734 = vmatprep.subr.mxu0 %v671
        %735 = vmatpush1.msra.mxu0 %v670
        %736 = vmatprep.subr.mxu0 %v675
        %737 = vmatpush1.msra.mxu0 %v674
        %738 = vmatprep.subr.mxu0 %v679
        %739 = vmatpush1.msra.mxu0 %v678
        %740 = vmatprep.subr.mxu0 %v683
        %741 = vmatpush1.msra.mxu0 %v682
        %742 = vmatprep.subr.mxu0 %v687
        %743 = vmatpush1.msra.mxu0 %v686
        %744 = vmatprep.subr.mxu0 0.0
        %745 = vmatpush1.msra.mxu0 0.0
        %746 = vmatprep.subr.mxu0 0.0
        %747 = vmatpush1.msra.mxu0 0.0
        %748 = vmatprep.subr.mxu0 0.0
        %749 = vmatpush1.msra.mxu0 0.0
        %750 = vmatprep.subr.mxu0 0.0
        %751 = vmatpush1.msra.mxu0 0.0
        %752 = vmatprep.subr.mxu0 0.0
        %753 = vmatpush1.msra.mxu0 0.0
        %754 = vmatprep.subr.mxu0 0.0
        %755 = vmatpush1.msra.mxu0 0.0
        %756 = vmatprep.subr.mxu0 0.0
        %757 = vmatpush1.msra.mxu0 0.0
        %758 = vmatprep.subr.mxu0 0.0
        %759 = vmatpush1.msra.mxu0 0.0
        %760 = vmatprep.subr.mxu0 0.0
        %761 = vmatpush1.msra.mxu0 0.0
        %762 = vmatprep.subr.mxu0 0.0
        %763 = vmatpush1.msra.mxu0 0.0
        %764 = vmatprep.subr.mxu0 0.0
        %765 = vmatpush1.msra.mxu0 0.0
        %766 = vmatprep.subr.mxu0 0.0
        %767 = vmatpush1.msra.mxu0 0.0
        %768 = vmatprep.subr.mxu0 0.0
        %769 = vmatpush1.msra.mxu0 0.0
        %770 = vmatprep.subr.mxu0 0.0
        %771 = vmatpush1.msra.mxu0 0.0
        %772 = vmatprep.subr.mxu0 0.0
        %773 = vmatpush1.msra.mxu0 0.0
        %774 = vmatprep.subr.mxu0 0.0
        %775 = vmatpush1.msra.mxu0 0.0
        %776 = vmatprep.mubr.f32.mxu0 0.0
        %777 = vmatmul.mubr.f32.gmra.mrb[0].mxu0 %v622
        %v778 = vpop.f32.mrb[0].mxu0
        %v779 = vadd.f32 %v695, %v778
        %v780 = vpop.f32.mrb[0].mxu0
        %v781 = vadd.f32 %v699, %v780
        %782 = vmatprep.mubr.f32.mxu0 0.0
        %783 = vmatmul.mubr.f32.gmra.mrb[0].mxu0 %v623
        %v784 = vpop.f32.mrb[0].mxu0
        %v785 = vadd.f32 %v695, %v784
        %v786 = vpop.f32.mrb[0].mxu0
        %v787 = vadd.f32 %v699, %v786
        %788 = vmatprep.mubr.f32.mxu0 0.0
        %789 = vmatmul.mubr.f32.gmra.mrb[0].mxu0 %v624
        %v790 = vpop.f32.mrb[0].mxu0
        %v791 = vadd.f32 %v695, %v790
        %v792 = vpop.f32.mrb[0].mxu0
        %v793 = vadd.f32 %v699, %v792
        %794 = vmatprep.mubr.f32.mxu0 0.0
        %795 = vmatmul.mubr.f32.gmra.mrb[0].mxu0 %v625
        %v796 = vpop.f32.mrb[0].mxu0
        %v797 = vadd.f32 %v695, %v796
        %v798 = vpop.f32.mrb[0].mxu0
        %v799 = vadd.f32 %v699, %v798
        %800 = vdwg.mxu0
        %801 = vmatprep.subr.mxu0 %v629
        %802 = vmatpush1.msra.mxu0 %v628
        %803 = vmatprep.subr.mxu0 %v633
        %804 = vmatpush1.msra.mxu0 %v632
        %805 = vmatprep.subr.mxu0 %v637
        %806 = vmatpush1.msra.mxu0 %v636
        %807 = vmatprep.subr.mxu0 %v641
        %808 = vmatpush1.msra.mxu0 %v640
        %809 = vmatprep.subr.mxu0 %v645
        %810 = vmatpush1.msra.mxu0 %v644
        %811 = vmatprep.subr.mxu0 %v649
        %812 = vmatpush1.msra.mxu0 %v648
        %813 = vmatprep.subr.mxu0 %v653
        %814 = vmatpush1.msra.mxu0 %v652
        %815 = vmatprep.subr.mxu0 %v657
        %816 = vmatpush1.msra.mxu0 %v656
        %817 = vmatprep.subr.mxu0 %v661
        %818 = vmatpush1.msra.mxu0 %v660
        %819 = vmatprep.subr.mxu0 %v665
        %820 = vmatpush1.msra.mxu0 %v664
        %821 = vmatprep.subr.mxu0 %v669
        %822 = vmatpush1.msra.mxu0 %v668
        %823 = vmatprep.subr.mxu0 %v673
        %824 = vmatpush1.msra.mxu0 %v672
        %825 = vmatprep.subr.mxu0 %v677
        %826 = vmatpush1.msra.mxu0 %v676
        %827 = vmatprep.subr.mxu0 %v681
        %828 = vmatpush1.msra.mxu0 %v680
        %829 = vmatprep.subr.mxu0 %v685
        %830 = vmatpush1.msra.mxu0 %v684
        %831 = vmatprep.subr.mxu0 %v689
        %832 = vmatpush1.msra.mxu0 %v688
        %833 = vmatprep.subr.mxu0 0.0
        %834 = vmatpush1.msra.mxu0 0.0
        %835 = vmatprep.subr.mxu0 0.0
        %836 = vmatpush1.msra.mxu0 0.0
        %837 = vmatprep.subr.mxu0 0.0
        %838 = vmatpush1.msra.mxu0 0.0
        %839 = vmatprep.subr.mxu0 0.0
        %840 = vmatpush1.msra.mxu0 0.0
        %841 = vmatprep.subr.mxu0 0.0
        %842 = vmatpush1.msra.mxu0 0.0
        %843 = vmatprep.subr.mxu0 0.0
        %844 = vmatpush1.msra.mxu0 0.0
        %845 = vmatprep.subr.mxu0 0.0
        %846 = vmatpush1.msra.mxu0 0.0
        %847 = vmatprep.subr.mxu0 0.0
        %848 = vmatpush1.msra.mxu0 0.0
        %849 = vmatprep.subr.mxu0 0.0
        %850 = vmatpush1.msra.mxu0 0.0
        %851 = vmatprep.subr.mxu0 0.0
        %852 = vmatpush1.msra.mxu0 0.0
        %853 = vmatprep.subr.mxu0 0.0
        %854 = vmatpush1.msra.mxu0 0.0
        %855 = vmatprep.subr.mxu0 0.0
        %856 = vmatpush1.msra.mxu0 0.0
        %857 = vmatprep.subr.mxu0 0.0
        %858 = vmatpush1.msra.mxu0 0.0
        %859 = vmatprep.subr.mxu0 0.0
        %860 = vmatpush1.msra.mxu0 0.0
        %861 = vmatprep.subr.mxu0 0.0
        %862 = vmatpush1.msra.mxu0 0.0
        %863 = vmatprep.subr.mxu0 0.0
        %864 = vmatpush1.msra.mxu0 0.0
        %865 = vmatprep.mubr.f32.mxu0 0.0
        %866 = vmatmul.mubr.f32.gmra.mrb[0].mxu0 %v622
        %v867 = vpop.f32.mrb[0].mxu0
        %v868 = vadd.f32 %v703, %v867
        %v869 = vpop.f32.mrb[0].mxu0
        %v870 = vadd.f32 %v707, %v869
        %871 = vmatprep.mubr.f32.mxu0 0.0
        %872 = vmatmul.mubr.f32.gmra.mrb[0].mxu0 %v623
        %v873 = vpop.f32.mrb[0].mxu0
        %v874 = vadd.f32 %v703, %v873
        %v875 = vpop.f32.mrb[0].mxu0
        %v876 = vadd.f32 %v707, %v875
        %877 = vmatprep.mubr.f32.mxu0 0.0
        %878 = vmatmul.mubr.f32.gmra.mrb[0].mxu0 %v624
        %v879 = vpop.f32.mrb[0].mxu0
        %v880 = vadd.f32 %v703, %v879
        %v881 = vpop.f32.mrb[0].mxu0
        %v882 = vadd.f32 %v707, %v881
        %883 = vmatprep.mubr.f32.mxu0 0.0
        %884 = vmatmul.mubr.f32.gmra.mrb[0].mxu0 %v625
        %v885 = vpop.f32.mrb[0].mxu0
        %v886 = vadd.f32 %v703, %v885
        %v887 = vpop.f32.mrb[0].mxu0
        %v888 = vadd.f32 %v707, %v887
        %889 = vdwg.mxu0
        %890 = vst [vmem:[#allocation2] sm:$0xff] %v779
        %891 = vst [vmem:[#allocation2 + $0x8] sm:$0xff] %v781
        %892 = vst [vmem:[#allocation2 + $0x10] sm:$0xff] %v868
        %893 = vst [vmem:[#allocation2 + $0x18] sm:$0xff] %v870
        %894 = vst [vmem:[#allocation2 + $0x20] sm:$0xff] %v785
        %895 = vst [vmem:[#allocation2 + $0x28] sm:$0xff] %v787
        %896 = vst [vmem:[#allocation2 + $0x30] sm:$0xff] %v874
        %897 = vst [vmem:[#allocation2 + $0x38] sm:$0xff] %v876
        %898 = vst [vmem:[#allocation2 + $0x40] sm:$0xff] %v791
        %899 = vst [vmem:[#allocation2 + $0x48] sm:$0xff] %v793
        %900 = vst [vmem:[#allocation2 + $0x50] sm:$0xff] %v880
        %901 = vst [vmem:[#allocation2 + $0x58] sm:$0xff] %v882
        %902 = vst [vmem:[#allocation2 + $0x60] sm:$0xff] %v797
        %903 = vst [vmem:[#allocation2 + $0x68] sm:$0xff] %v799
        %904 = vst [vmem:[#allocation2 + $0x70] sm:$0xff] %v886
        %905 = vst [vmem:[#allocation2 + $0x78] sm:$0xff] %v888
        %v906 = vld [vmem:[#allocation4] sm:$0xff]
        %v907 = vld [vmem:[#allocation5] sm:$0xff]
        %v908 = vld [vmem:[#allocation2] sm:$0xff]
        %v909 = vld [vmem:[#allocation2 + $0x8] sm:$0xff]
        %v910 = vld [vmem:[#allocation2 + $0x10] sm:$0xff]
        %v911 = vld [vmem:[#allocation2 + $0x18] sm:$0xff]
        %v912 = vld [vmem:[#allocation15] sm:$0xff]
        %v913 = vld [vmem:[#allocation15 + $0x8] sm:$0xff]
        %v914 = vld [vmem:[#allocation15 + $0x10] sm:$0xff]
        %v915 = vld [vmem:[#allocation15 + $0x18] sm:$0xff]
        %v916 = vld [vmem:[#allocation15 + $0x20] sm:$0xff]
        %v917 = vld [vmem:[#allocation15 + $0x28] sm:$0xff]
        %v918 = vld [vmem:[#allocation15 + $0x30] sm:$0xff]
        %v919 = vld [vmem:[#allocation15 + $0x38] sm:$0xff]
        %v920 = vld [vmem:[#allocation15 + $0x40] sm:$0xff]
        %v921 = vld [vmem:[#allocation15 + $0x48] sm:$0xff]
        %v922 = vld [vmem:[#allocation15 + $0x50] sm:$0xff]
        %v923 = vld [vmem:[#allocation15 + $0x58] sm:$0xff]
        %v924 = vld [vmem:[#allocation15 + $0x60] sm:$0xff]
        %v925 = vld [vmem:[#allocation15 + $0x68] sm:$0xff]
        %v926 = vld [vmem:[#allocation15 + $0x70] sm:$0xff]
        %v927 = vld [vmem:[#allocation15 + $0x78] sm:$0xff]
        %v928 = vld [vmem:[#allocation15 + $0x80] sm:$0xff]
        %v929 = vld [vmem:[#allocation15 + $0x88] sm:$0xff]
        %v930 = vld [vmem:[#allocation15 + $0x90] sm:$0xff]
        %v931 = vld [vmem:[#allocation15 + $0x98] sm:$0xff]
        %v932 = vld [vmem:[#allocation15 + $0xa0] sm:$0xff]
        %v933 = vld [vmem:[#allocation15 + $0xa8] sm:$0xff]
        %v934 = vld [vmem:[#allocation15 + $0xb0] sm:$0xff]
        %v935 = vld [vmem:[#allocation15 + $0xb8] sm:$0xff]
        %v936 = vld [vmem:[#allocation15 + $0xc0] sm:$0xff]
        %v937 = vld [vmem:[#allocation15 + $0xc8] sm:$0xff]
        %v938 = vld [vmem:[#allocation15 + $0xd0] sm:$0xff]
        %v939 = vld [vmem:[#allocation15 + $0xd8] sm:$0xff]
        %v940 = vld [vmem:[#allocation15 + $0xe0] sm:$0xff]
        %v941 = vld [vmem:[#allocation15 + $0xe8] sm:$0xff]
        %v942 = vld [vmem:[#allocation15 + $0xf0] sm:$0xff]
        %v943 = vld [vmem:[#allocation15 + $0xf8] sm:$0xff]
        %v944 = vld [vmem:[#allocation15 + $0x100] sm:$0xff]
        %v945 = vld [vmem:[#allocation15 + $0x108] sm:$0xff]
        %v946 = vld [vmem:[#allocation15 + $0x110] sm:$0xff]
        %v947 = vld [vmem:[#allocation15 + $0x118] sm:$0xff]
        %v948 = vld [vmem:[#allocation15 + $0x120] sm:$0xff]
        %v949 = vld [vmem:[#allocation15 + $0x128] sm:$0xff]
        %v950 = vld [vmem:[#allocation15 + $0x130] sm:$0xff]
        %v951 = vld [vmem:[#allocation15 + $0x138] sm:$0xff]
        %v952 = vld [vmem:[#allocation15 + $0x140] sm:$0xff]
        %v953 = vld [vmem:[#allocation15 + $0x148] sm:$0xff]
        %v954 = vld [vmem:[#allocation15 + $0x150] sm:$0xff]
        %v955 = vld [vmem:[#allocation15 + $0x158] sm:$0xff]
        %v956 = vld [vmem:[#allocation15 + $0x160] sm:$0xff]
        %v957 = vld [vmem:[#allocation15 + $0x168] sm:$0xff]
        %v958 = vld [vmem:[#allocation15 + $0x170] sm:$0xff]
        %v959 = vld [vmem:[#allocation15 + $0x178] sm:$0xff]
        %v960 = vld [vmem:[#allocation15 + $0x180] sm:$0xff]
        %v961 = vld [vmem:[#allocation15 + $0x188] sm:$0xff]
        %v962 = vld [vmem:[#allocation15 + $0x190] sm:$0xff]
        %v963 = vld [vmem:[#allocation15 + $0x198] sm:$0xff]
        %v964 = vld [vmem:[#allocation15 + $0x1a0] sm:$0xff]
        %v965 = vld [vmem:[#allocation15 + $0x1a8] sm:$0xff]
        %v966 = vld [vmem:[#allocation15 + $0x1b0] sm:$0xff]
        %v967 = vld [vmem:[#allocation15 + $0x1b8] sm:$0xff]
        %v968 = vld [vmem:[#allocation15 + $0x1c0] sm:$0xff]
        %v969 = vld [vmem:[#allocation15 + $0x1c8] sm:$0xff]
        %v970 = vld [vmem:[#allocation15 + $0x1d0] sm:$0xff]
        %v971 = vld [vmem:[#allocation15 + $0x1d8] sm:$0xff]
        %v972 = vld [vmem:[#allocation15 + $0x1e0] sm:$0xff]
        %v973 = vld [vmem:[#allocation15 + $0x1e8] sm:$0xff]
        %v974 = vld [vmem:[#allocation15 + $0x1f0] sm:$0xff]
        %v975 = vld [vmem:[#allocation15 + $0x1f8] sm:$0xff]
        %976 = vmatprep.subr.mxu0 %v913
        %977 = vmatpush1.msra.mxu0 %v912
        %978 = vmatprep.subr.mxu0 %v917
        %979 = vmatpush1.msra.mxu0 %v916
        %980 = vmatprep.subr.mxu0 %v921
        %981 = vmatpush1.msra.mxu0 %v920
        %982 = vmatprep.subr.mxu0 %v925
        %983 = vmatpush1.msra.mxu0 %v924
        %984 = vmatprep.subr.mxu0 %v929
        %985 = vmatpush1.msra.mxu0 %v928
        %986 = vmatprep.subr.mxu0 %v933
        %987 = vmatpush1.msra.mxu0 %v932
        %988 = vmatprep.subr.mxu0 %v937
        %989 = vmatpush1.msra.mxu0 %v936
        %990 = vmatprep.subr.mxu0 %v941
        %991 = vmatpush1.msra.mxu0 %v940
        %992 = vmatprep.subr.mxu0 %v945
        %993 = vmatpush1.msra.mxu0 %v944
        %994 = vmatprep.subr.mxu0 %v949
        %995 = vmatpush1.msra.mxu0 %v948
        %996 = vmatprep.subr.mxu0 %v953
        %997 = vmatpush1.msra.mxu0 %v952
        %998 = vmatprep.subr.mxu0 %v957
        %999 = vmatpush1.msra.mxu0 %v956
        %1000 = vmatprep.subr.mxu0 %v961
        %1001 = vmatpush1.msra.mxu0 %v960
        %1002 = vmatprep.subr.mxu0 %v965
        %1003 = vmatpush1.msra.mxu0 %v964
        %1004 = vmatprep.subr.mxu0 %v969
        %1005 = vmatpush1.msra.mxu0 %v968
        %1006 = vmatprep.subr.mxu0 %v973
        %1007 = vmatpush1.msra.mxu0 %v972
        %1008 = vmatprep.subr.mxu0 0.0
        %1009 = vmatpush1.msra.mxu0 0.0
        %1010 = vmatprep.subr.mxu0 0.0
        %1011 = vmatpush1.msra.mxu0 0.0
        %1012 = vmatprep.subr.mxu0 0.0
        %1013 = vmatpush1.msra.mxu0 0.0
        %1014 = vmatprep.subr.mxu0 0.0
        %1015 = vmatpush1.msra.mxu0 0.0
        %1016 = vmatprep.subr.mxu0 0.0
        %1017 = vmatpush1.msra.mxu0 0.0
        %1018 = vmatprep.subr.mxu0 0.0
        %1019 = vmatpush1.msra.mxu0 0.0
        %1020 = vmatprep.subr.mxu0 0.0
        %1021 = vmatpush1.msra.mxu0 0.0
        %1022 = vmatprep.subr.mxu0 0.0
        %1023 = vmatpush1.msra.mxu0 0.0
        %1024 = vmatprep.subr.mxu0 0.0
        %1025 = vmatpush1.msra.mxu0 0.0
        %1026 = vmatprep.subr.mxu0 0.0
        %1027 = vmatpush1.msra.mxu0 0.0
        %1028 = vmatprep.subr.mxu0 0.0
        %1029 = vmatpush1.msra.mxu0 0.0
        %1030 = vmatprep.subr.mxu0 0.0
        %1031 = vmatpush1.msra.mxu0 0.0
        %1032 = vmatprep.subr.mxu0 0.0
        %1033 = vmatpush1.msra.mxu0 0.0
        %1034 = vmatprep.subr.mxu0 0.0
        %1035 = vmatpush1.msra.mxu0 0.0
        %1036 = vmatprep.subr.mxu0 0.0
        %1037 = vmatpush1.msra.mxu0 0.0
        %1038 = vmatprep.subr.mxu0 0.0
        %1039 = vmatpush1.msra.mxu0 0.0
        %1040 = vmatprep.mubr.f32.mxu0 0.0
        %1041 = vmatmul.mubr.f32.gmra.mrb[0].mxu0 %v906
        %v1042 = vpop.f32.mrb[0].mxu0
        %v1043 = vadd.f32 0.0, %v1042
        %v1044 = vpop.f32.mrb[0].mxu0
        %v1045 = vadd.f32 0.0, %v1044
        %1046 = vdwg.mxu0
        %1047 = vmatprep.subr.mxu0 %v915
        %1048 = vmatpush1.msra.mxu0 %v914
        %1049 = vmatprep.subr.mxu0 %v919
        %1050 = vmatpush1.msra.mxu0 %v918
        %1051 = vmatprep.subr.mxu0 %v923
        %1052 = vmatpush1.msra.mxu0 %v922
        %1053 = vmatprep.subr.mxu0 %v927
        %1054 = vmatpush1.msra.mxu0 %v926
        %1055 = vmatprep.subr.mxu0 %v931
        %1056 = vmatpush1.msra.mxu0 %v930
        %1057 = vmatprep.subr.mxu0 %v935
        %1058 = vmatpush1.msra.mxu0 %v934
        %1059 = vmatprep.subr.mxu0 %v939
        %1060 = vmatpush1.msra.mxu0 %v938
        %1061 = vmatprep.subr.mxu0 %v943
        %1062 = vmatpush1.msra.mxu0 %v942
        %1063 = vmatprep.subr.mxu0 %v947
        %1064 = vmatpush1.msra.mxu0 %v946
        %1065 = vmatprep.subr.mxu0 %v951
        %1066 = vmatpush1.msra.mxu0 %v950
        %1067 = vmatprep.subr.mxu0 %v955
        %1068 = vmatpush1.msra.mxu0 %v954
        %1069 = vmatprep.subr.mxu0 %v959
        %1070 = vmatpush1.msra.mxu0 %v958
        %1071 = vmatprep.subr.mxu0 %v963
        %1072 = vmatpush1.msra.mxu0 %v962
        %1073 = vmatprep.subr.mxu0 %v967
        %1074 = vmatpush1.msra.mxu0 %v966
        %1075 = vmatprep.subr.mxu0 %v971
        %1076 = vmatpush1.msra.mxu0 %v970
        %1077 = vmatprep.subr.mxu0 %v975
        %1078 = vmatpush1.msra.mxu0 %v974
        %1079 = vmatprep.subr.mxu0 0.0
        %1080 = vmatpush1.msra.mxu0 0.0
        %1081 = vmatprep.subr.mxu0 0.0
        %1082 = vmatpush1.msra.mxu0 0.0
        %1083 = vmatprep.subr.mxu0 0.0
        %1084 = vmatpush1.msra.mxu0 0.0
        %1085 = vmatprep.subr.mxu0 0.0
        %1086 = vmatpush1.msra.mxu0 0.0
        %1087 = vmatprep.subr.mxu0 0.0
        %1088 = vmatpush1.msra.mxu0 0.0
        %1089 = vmatprep.subr.mxu0 0.0
        %1090 = vmatpush1.msra.mxu0 0.0
        %1091 = vmatprep.subr.mxu0 0.0
        %1092 = vmatpush1.msra.mxu0 0.0
        %1093 = vmatprep.subr.mxu0 0.0
        %1094 = vmatpush1.msra.mxu0 0.0
        %1095 = vmatprep.subr.mxu0 0.0
        %1096 = vmatpush1.msra.mxu0 0.0
        %1097 = vmatprep.subr.mxu0 0.0
        %1098 = vmatpush1.msra.mxu0 0.0
        %1099 = vmatprep.subr.mxu0 0.0
        %1100 = vmatpush1.msra.mxu0 0.0
        %1101 = vmatprep.subr.mxu0 0.0
        %1102 = vmatpush1.msra.mxu0 0.0
        %1103 = vmatprep.subr.mxu0 0.0
        %1104 = vmatpush1.msra.mxu0 0.0
        %1105 = vmatprep.subr.mxu0 0.0
        %1106 = vmatpush1.msra.mxu0 0.0
        %1107 = vmatprep.subr.mxu0 0.0
        %1108 = vmatpush1.msra.mxu0 0.0
        %1109 = vmatprep.subr.mxu0 0.0
        %1110 = vmatpush1.msra.mxu0 0.0
        %1111 = vmatprep.mubr.f32.mxu0 0.0
        %1112 = vmatmul.mubr.f32.gmra.mrb[0].mxu0 %v906
        %v1113 = vpop.f32.mrb[0].mxu0
        %v1114 = vadd.f32 0.0, %v1113
        %v1115 = vpop.f32.mrb[0].mxu0
        %v1116 = vadd.f32 0.0, %v1115
        %1117 = vdwg.mxu0
        %v1118 = vadd.f32 %v908, %v1043
        %v1119 = vadd.f32 %v909, %v1045
        %v1120 = vadd.f32 %v910, %v1114
        %v1121 = vadd.f32 %v911, %v1116
        %v1122 = vxor.u32 %v1118, 2147483648
        %v1123 = vxor.u32 %v1119, 2147483648
        %v1124 = vxor.u32 %v1120, 2147483648
        %v1125 = vmul.f32 %v1122, 1.442695
        %v1126 = vpow.pop %v1125
        %v1127 = vmul.f32 %v1123, 1.442695
        %v1128 = vpow.pop %v1127
        %v1129 = vmul.f32 %v1124, 1.442695
        %v1130 = vpow.pop %v1129
        %v1131 = vadd.f32 %v1126, 1.0
        %v1132 = vadd.f32 %v1128, 1.0
        %v1133 = vadd.f32 %v1130, 1.0
        %v1134 = vrcp.pop %v1131
        %v1135 = vmul.f32 1.0, %v1134
        %v1136 = vrcp.pop %v1132
        %v1137 = vmul.f32 1.0, %v1136
        %v1138 = vrcp.pop %v1133
        %v1139 = vmul.f32 1.0, %v1138
        %v1140 = vtanh.pop %v1121
        %v1141 = vmul.f32 %v1137, %v907
        %v1142 = vmul.f32 %v1135, %v1140
        %v1143 = vadd.f32 %v1141, %v1142
        %v1144 = vtanh.pop %v1143
        %v1145 = vmul.f32 %v1139, %v1144
        %1146 = vst [vmem:[#allocation3] sm:$0xff] %v1145
        %v1147 = vld [vmem:[#allocation2 + $0x20] sm:$0xff]
        %v1148 = vld [vmem:[#allocation2 + $0x28] sm:$0xff]
        %v1149 = vld [vmem:[#allocation2 + $0x30] sm:$0xff]
        %v1150 = vld [vmem:[#allocation2 + $0x38] sm:$0xff]
        %v1151 = vld [vmem:[#allocation15] sm:$0xff]
        %v1152 = vld [vmem:[#allocation15 + $0x8] sm:$0xff]
        %v1153 = vld [vmem:[#allocation15 + $0x10] sm:$0xff]
        %v1154 = vld [vmem:[#allocation15 + $0x18] sm:$0xff]
        %v1155 = vld [vmem:[#allocation15 + $0x20] sm:$0xff]
        %v1156 = vld [vmem:[#allocation15 + $0x28] sm:$0xff]
        %v1157 = vld [vmem:[#allocation15 + $0x30] sm:$0xff]
        %v1158 = vld [vmem:[#allocation15 + $0x38] sm:$0xff]
        %v1159 = vld [vmem:[#allocation15 + $0x40] sm:$0xff]
        %v1160 = vld [vmem:[#allocation15 + $0x48] sm:$0xff]
        %v1161 = vld [vmem:[#allocation15 + $0x50] sm:$0xff]
        %v1162 = vld [vmem:[#allocation15 + $0x58] sm:$0xff]
        %v1163 = vld [vmem:[#allocation15 + $0x60] sm:$0xff]
        %v1164 = vld [vmem:[#allocation15 + $0x68] sm:$0xff]
        %v1165 = vld [vmem:[#allocation15 + $0x70] sm:$0xff]
        %v1166 = vld [vmem:[#allocation15 + $0x78] sm:$0xff]
        %v1167 = vld [vmem:[#allocation15 + $0x80] sm:$0xff]
        %v1168 = vld [vmem:[#allocation15 + $0x88] sm:$0xff]
        %v1169 = vld [vmem:[#allocation15 + $0x90] sm:$0xff]
        %v1170 = vld [vmem:[#allocation15 + $0x98] sm:$0xff]
        %v1171 = vld [vmem:[#allocation15 + $0xa0] sm:$0xff]
        %v1172 = vld [vmem:[#allocation15 + $0xa8] sm:$0xff]
        %v1173 = vld [vmem:[#allocation15 + $0xb0] sm:$0xff]
        %v1174 = vld [vmem:[#allocation15 + $0xb8] sm:$0xff]
        %v1175 = vld [vmem:[#allocation15 + $0xc0] sm:$0xff]
        %v1176 = vld [vmem:[#allocation15 + $0xc8] sm:$0xff]
        %v1177 = vld [vmem:[#allocation15 + $0xd0] sm:$0xff]
        %v1178 = vld [vmem:[#allocation15 + $0xd8] sm:$0xff]
        %v1179 = vld [vmem:[#allocation15 + $0xe0] sm:$0xff]
        %v1180 = vld [vmem:[#allocation15 + $0xe8] sm:$0xff]
        %v1181 = vld [vmem:[#allocation15 + $0xf0] sm:$0xff]
        %v1182 = vld [vmem:[#allocation15 + $0xf8] sm:$0xff]
        %v1183 = vld [vmem:[#allocation15 + $0x100] sm:$0xff]
        %v1184 = vld [vmem:[#allocation15 + $0x108] sm:$0xff]
        %v1185 = vld [vmem:[#allocation15 + $0x110] sm:$0xff]
        %v1186 = vld [vmem:[#allocation15 + $0x118] sm:$0xff]
        %v1187 = vld [vmem:[#allocation15 + $0x120] sm:$0xff]
        %v1188 = vld [vmem:[#allocation15 + $0x128] sm:$0xff]
        %v1189 = vld [vmem:[#allocation15 + $0x130] sm:$0xff]
        %v1190 = vld [vmem:[#allocation15 + $0x138] sm:$0xff]
        %v1191 = vld [vmem:[#allocation15 + $0x140] sm:$0xff]
        %v1192 = vld [vmem:[#allocation15 + $0x148] sm:$0xff]
        %v1193 = vld [vmem:[#allocation15 + $0x150] sm:$0xff]
        %v1194 = vld [vmem:[#allocation15 + $0x158] sm:$0xff]
        %v1195 = vld [vmem:[#allocation15 + $0x160] sm:$0xff]
        %v1196 = vld [vmem:[#allocation15 + $0x168] sm:$0xff]
        %v1197 = vld [vmem:[#allocation15 + $0x170] sm:$0xff]
        %v1198 = vld [vmem:[#allocation15 + $0x178] sm:$0xff]
        %v1199 = vld [vmem:[#allocation15 + $0x180] sm:$0xff]
        %v1200 = vld [vmem:[#allocation15 + $0x188] sm:$0xff]
        %v1201 = vld [vmem:[#allocation15 + $0x190] sm:$0xff]
        %v1202 = vld [vmem:[#allocation15 + $0x198] sm:$0xff]
        %v1203 = vld [vmem:[#allocation15 + $0x1a0] sm:$0xff]
        %v1204 = vld [vmem:[#allocation15 + $0x1a8] sm:$0xff]
        %v1205 = vld [vmem:[#allocation15 + $0x1b0] sm:$0xff]
        %v1206 = vld [vmem:[#allocation15 + $0x1b8] sm:$0xff]
        %v1207 = vld [vmem:[#allocation15 + $0x1c0] sm:$0xff]
        %v1208 = vld [vmem:[#allocation15 + $0x1c8] sm:$0xff]
        %v1209 = vld [vmem:[#allocation15 + $0x1d0] sm:$0xff]
        %v1210 = vld [vmem:[#allocation15 + $0x1d8] sm:$0xff]
        %v1211 = vld [vmem:[#allocation15 + $0x1e0] sm:$0xff]
        %v1212 = vld [vmem:[#allocation15 + $0x1e8] sm:$0xff]
        %v1213 = vld [vmem:[#allocation15 + $0x1f0] sm:$0xff]
        %v1214 = vld [vmem:[#allocation15 + $0x1f8] sm:$0xff]
        %1215 = vmatprep.subr.mxu0 %v1152
        %1216 = vmatpush1.msra.mxu0 %v1151
        %1217 = vmatprep.subr.mxu0 %v1156
        %1218 = vmatpush1.msra.mxu0 %v1155
        %1219 = vmatprep.subr.mxu0 %v1160
        %1220 = vmatpush1.msra.mxu0 %v1159
        %1221 = vmatprep.subr.mxu0 %v1164
        %1222 = vmatpush1.msra.mxu0 %v1163
        %1223 = vmatprep.subr.mxu0 %v1168
        %1224 = vmatpush1.msra.mxu0 %v1167
        %1225 = vmatprep.subr.mxu0 %v1172
        %1226 = vmatpush1.msra.mxu0 %v1171
        %1227 = vmatprep.subr.mxu0 %v1176
        %1228 = vmatpush1.msra.mxu0 %v1175
        %1229 = vmatprep.subr.mxu0 %v1180
        %1230 = vmatpush1.msra.mxu0 %v1179
        %1231 = vmatprep.subr.mxu0 %v1184
        %1232 = vmatpush1.msra.mxu0 %v1183
        %1233 = vmatprep.subr.mxu0 %v1188
        %1234 = vmatpush1.msra.mxu0 %v1187
        %1235 = vmatprep.subr.mxu0 %v1192
        %1236 = vmatpush1.msra.mxu0 %v1191
        %1237 = vmatprep.subr.mxu0 %v1196
        %1238 = vmatpush1.msra.mxu0 %v1195
        %1239 = vmatprep.subr.mxu0 %v1200
        %1240 = vmatpush1.msra.mxu0 %v1199
        %1241 = vmatprep.subr.mxu0 %v1204
        %1242 = vmatpush1.msra.mxu0 %v1203
        %1243 = vmatprep.subr.mxu0 %v1208
        %1244 = vmatpush1.msra.mxu0 %v1207
        %1245 = vmatprep.subr.mxu0 %v1212
        %1246 = vmatpush1.msra.mxu0 %v1211
        %1247 = vmatprep.subr.mxu0 0.0
        %1248 = vmatpush1.msra.mxu0 0.0
        %1249 = vmatprep.subr.mxu0 0.0
        %1250 = vmatpush1.msra.mxu0 0.0
        %1251 = vmatprep.subr.mxu0 0.0
        %1252 = vmatpush1.msra.mxu0 0.0
        %1253 = vmatprep.subr.mxu0 0.0
        %1254 = vmatpush1.msra.mxu0 0.0
        %1255 = vmatprep.subr.mxu0 0.0
        %1256 = vmatpush1.msra.mxu0 0.0
        %1257 = vmatprep.subr.mxu0 0.0
        %1258 = vmatpush1.msra.mxu0 0.0
        %1259 = vmatprep.subr.mxu0 0.0
        %1260 = vmatpush1.msra.mxu0 0.0
        %1261 = vmatprep.subr.mxu0 0.0
        %1262 = vmatpush1.msra.mxu0 0.0
        %1263 = vmatprep.subr.mxu0 0.0
        %1264 = vmatpush1.msra.mxu0 0.0
        %1265 = vmatprep.subr.mxu0 0.0
        %1266 = vmatpush1.msra.mxu0 0.0
        %1267 = vmatprep.subr.mxu0 0.0
        %1268 = vmatpush1.msra.mxu0 0.0
        %1269 = vmatprep.subr.mxu0 0.0
        %1270 = vmatpush1.msra.mxu0 0.0
        %1271 = vmatprep.subr.mxu0 0.0
        %1272 = vmatpush1.msra.mxu0 0.0
        %1273 = vmatprep.subr.mxu0 0.0
        %1274 = vmatpush1.msra.mxu0 0.0
        %1275 = vmatprep.subr.mxu0 0.0
        %1276 = vmatpush1.msra.mxu0 0.0
        %1277 = vmatprep.subr.mxu0 0.0
        %1278 = vmatpush1.msra.mxu0 0.0
        %1279 = vmatprep.mubr.f32.mxu0 0.0
        %1280 = vmatmul.mubr.f32.gmra.mrb[0].mxu0 %v1145
        %v1281 = vpop.f32.mrb[0].mxu0
        %v1282 = vadd.f32 0.0, %v1281
        %v1283 = vpop.f32.mrb[0].mxu0
        %v1284 = vadd.f32 0.0, %v1283
        %1285 = vdwg.mxu0
        %1286 = vmatprep.subr.mxu0 %v1154
        %1287 = vmatpush1.msra.mxu0 %v1153
        %1288 = vmatprep.subr.mxu0 %v1158
        %1289 = vmatpush1.msra.mxu0 %v1157
        %1290 = vmatprep.subr.mxu0 %v1162
        %1291 = vmatpush1.msra.mxu0 %v1161
        %1292 = vmatprep.subr.mxu0 %v1166
        %1293 = vmatpush1.msra.mxu0 %v1165
        %1294 = vmatprep.subr.mxu0 %v1170
        %1295 = vmatpush1.msra.mxu0 %v1169
        %1296 = vmatprep.subr.mxu0 %v1174
        %1297 = vmatpush1.msra.mxu0 %v1173
        %1298 = vmatprep.subr.mxu0 %v1178
        %1299 = vmatpush1.msra.mxu0 %v1177
        %1300 = vmatprep.subr.mxu0 %v1182
        %1301 = vmatpush1.msra.mxu0 %v1181
        %1302 = vmatprep.subr.mxu0 %v1186
        %1303 = vmatpush1.msra.mxu0 %v1185
        %1304 = vmatprep.subr.mxu0 %v1190
        %1305 = vmatpush1.msra.mxu0 %v1189
        %1306 = vmatprep.subr.mxu0 %v1194
        %1307 = vmatpush1.msra.mxu0 %v1193
        %1308 = vmatprep.subr.mxu0 %v1198
        %1309 = vmatpush1.msra.mxu0 %v1197
        %1310 = vmatprep.subr.mxu0 %v1202
        %1311 = vmatpush1.msra.mxu0 %v1201
        %1312 = vmatprep.subr.mxu0 %v1206
        %1313 = vmatpush1.msra.mxu0 %v1205
        %1314 = vmatprep.subr.mxu0 %v1210
        %1315 = vmatpush1.msra.mxu0 %v1209
        %1316 = vmatprep.subr.mxu0 %v1214
        %1317 = vmatpush1.msra.mxu0 %v1213
        %1318 = vmatprep.subr.mxu0 0.0
        %1319 = vmatpush1.msra.mxu0 0.0
        %1320 = vmatprep.subr.mxu0 0.0
        %1321 = vmatpush1.msra.mxu0 0.0
        %1322 = vmatprep.subr.mxu0 0.0
        %1323 = vmatpush1.msra.mxu0 0.0
        %1324 = vmatprep.subr.mxu0 0.0
        %1325 = vmatpush1.msra.mxu0 0.0
        %1326 = vmatprep.subr.mxu0 0.0
        %1327 = vmatpush1.msra.mxu0 0.0
        %1328 = vmatprep.subr.mxu0 0.0
        %1329 = vmatpush1.msra.mxu0 0.0
        %1330 = vmatprep.subr.mxu0 0.0
        %1331 = vmatpush1.msra.mxu0 0.0
        %1332 = vmatprep.subr.mxu0 0.0
        %1333 = vmatpush1.msra.mxu0 0.0
        %1334 = vmatprep.subr.mxu0 0.0
        %1335 = vmatpush1.msra.mxu0 0.0
        %1336 = vmatprep.subr.mxu0 0.0
        %1337 = vmatpush1.msra.mxu0 0.0
        %1338 = vmatprep.subr.mxu0 0.0
        %1339 = vmatpush1.msra.mxu0 0.0
        %1340 = vmatprep.subr.mxu0 0.0
        %1341 = vmatpush1.msra.mxu0 0.0
        %1342 = vmatprep.subr.mxu0 0.0
        %1343 = vmatpush1.msra.mxu0 0.0
        %1344 = vmatprep.subr.mxu0 0.0
        %1345 = vmatpush1.msra.mxu0 0.0
        %1346 = vmatprep.subr.mxu0 0.0
        %1347 = vmatpush1.msra.mxu0 0.0
        %1348 = vmatprep.subr.mxu0 0.0
        %1349 = vmatpush1.msra.mxu0 0.0
        %1350 = vmatprep.mubr.f32.mxu0 0.0
        %1351 = vmatmul.mubr.f32.gmra.mrb[0].mxu0 %v1145
        %v1352 = vpop.f32.mrb[0].mxu0
        %v1353 = vadd.f32 0.0, %v1352
        %v1354 = vpop.f32.mrb[0].mxu0
        %v1355 = vadd.f32 0.0, %v1354
        %1356 = vdwg.mxu0
        %v1357 = vadd.f32 %v1147, %v1282
        %v1358 = vadd.f32 %v1148, %v1284
        %v1359 = vadd.f32 %v1149, %v1353
        %v1360 = vadd.f32 %v1150, %v1355
        %v1361 = vxor.u32 %v1357, 2147483648
        %v1362 = vxor.u32 %v1358, 2147483648
        %v1363 = vxor.u32 %v1359, 2147483648
        %v1364 = vmul.f32 %v1361, 1.442695
        %v1365 = vpow.pop %v1364
        %v1366 = vmul.f32 %v1362, 1.442695
        %v1367 = vpow.pop %v1366
        %v1368 = vmul.f32 %v1363, 1.442695
        %v1369 = vpow.pop %v1368
        %v1370 = vadd.f32 %v1365, 1.0
        %v1371 = vadd.f32 %v1367, 1.0
        %v1372 = vadd.f32 %v1369, 1.0
        %v1373 = vrcp.pop %v1370
        %v1374 = vmul.f32 1.0, %v1373
        %v1375 = vrcp.pop %v1371
        %v1376 = vmul.f32 1.0, %v1375
        %v1377 = vrcp.pop %v1372
        %v1378 = vmul.f32 1.0, %v1377
        %v1379 = vtanh.pop %v1360
        %v1380 = vmul.f32 %v1376, %v1143
        %v1381 = vmul.f32 %v1374, %v1379
        %v1382 = vadd.f32 %v1380, %v1381
        %v1383 = vtanh.pop %v1382
        %v1384 = vmul.f32 %v1378, %v1383
        %1385 = vst [vmem:[#allocation3 + $0x8] sm:$0xff] %v1384
        %v1386 = vld [vmem:[#allocation2 + $0x40] sm:$0xff]
        %v1387 = vld [vmem:[#allocation2 + $0x48] sm:$0xff]
        %v1388 = vld [vmem:[#allocation2 + $0x50] sm:$0xff]
        %v1389 = vld [vmem:[#allocation2 + $0x58] sm:$0xff]
        %v1390 = vld [vmem:[#allocation15] sm:$0xff]
        %v1391 = vld [vmem:[#allocation15 + $0x8] sm:$0xff]
        %v1392 = vld [vmem:[#allocation15 + $0x10] sm:$0xff]
        %v1393 = vld [vmem:[#allocation15 + $0x18] sm:$0xff]
        %v1394 = vld [vmem:[#allocation15 + $0x20] sm:$0xff]
        %v1395 = vld [vmem:[#allocation15 + $0x28] sm:$0xff]
        %v1396 = vld [vmem:[#allocation15 + $0x30] sm:$0xff]
        %v1397 = vld [vmem:[#allocation15 + $0x38] sm:$0xff]
        %v1398 = vld [vmem:[#allocation15 + $0x40] sm:$0xff]
        %v1399 = vld [vmem:[#allocation15 + $0x48] sm:$0xff]
        %v1400 = vld [vmem:[#allocation15 + $0x50] sm:$0xff]
        %v1401 = vld [vmem:[#allocation15 + $0x58] sm:$0xff]
        %v1402 = vld [vmem:[#allocation15 + $0x60] sm:$0xff]
        %v1403 = vld [vmem:[#allocation15 + $0x68] sm:$0xff]
        %v1404 = vld [vmem:[#allocation15 + $0x70] sm:$0xff]
        %v1405 = vld [vmem:[#allocation15 + $0x78] sm:$0xff]
        %v1406 = vld [vmem:[#allocation15 + $0x80] sm:$0xff]
        %v1407 = vld [vmem:[#allocation15 + $0x88] sm:$0xff]
        %v1408 = vld [vmem:[#allocation15 + $0x90] sm:$0xff]
        %v1409 = vld [vmem:[#allocation15 + $0x98] sm:$0xff]
        %v1410 = vld [vmem:[#allocation15 + $0xa0] sm:$0xff]
        %v1411 = vld [vmem:[#allocation15 + $0xa8] sm:$0xff]
        %v1412 = vld [vmem:[#allocation15 + $0xb0] sm:$0xff]
        %v1413 = vld [vmem:[#allocation15 + $0xb8] sm:$0xff]
        %v1414 = vld [vmem:[#allocation15 + $0xc0] sm:$0xff]
        %v1415 = vld [vmem:[#allocation15 + $0xc8] sm:$0xff]
        %v1416 = vld [vmem:[#allocation15 + $0xd0] sm:$0xff]
        %v1417 = vld [vmem:[#allocation15 + $0xd8] sm:$0xff]
        %v1418 = vld [vmem:[#allocation15 + $0xe0] sm:$0xff]
        %v1419 = vld [vmem:[#allocation15 + $0xe8] sm:$0xff]
        %v1420 = vld [vmem:[#allocation15 + $0xf0] sm:$0xff]
        %v1421 = vld [vmem:[#allocation15 + $0xf8] sm:$0xff]
        %v1422 = vld [vmem:[#allocation15 + $0x100] sm:$0xff]
        %v1423 = vld [vmem:[#allocation15 + $0x108] sm:$0xff]
        %v1424 = vld [vmem:[#allocation15 + $0x110] sm:$0xff]
        %v1425 = vld [vmem:[#allocation15 + $0x118] sm:$0xff]
        %v1426 = vld [vmem:[#allocation15 + $0x120] sm:$0xff]
        %v1427 = vld [vmem:[#allocation15 + $0x128] sm:$0xff]
        %v1428 = vld [vmem:[#allocation15 + $0x130] sm:$0xff]
        %v1429 = vld [vmem:[#allocation15 + $0x138] sm:$0xff]
        %v1430 = vld [vmem:[#allocation15 + $0x140] sm:$0xff]
        %v1431 = vld [vmem:[#allocation15 + $0x148] sm:$0xff]
        %v1432 = vld [vmem:[#allocation15 + $0x150] sm:$0xff]
        %v1433 = vld [vmem:[#allocation15 + $0x158] sm:$0xff]
        %v1434 = vld [vmem:[#allocation15 + $0x160] sm:$0xff]
        %v1435 = vld [vmem:[#allocation15 + $0x168] sm:$0xff]
        %v1436 = vld [vmem:[#allocation15 + $0x170] sm:$0xff]
        %v1437 = vld [vmem:[#allocation15 + $0x178] sm:$0xff]
        %v1438 = vld [vmem:[#allocation15 + $0x180] sm:$0xff]
        %v1439 = vld [vmem:[#allocation15 + $0x188] sm:$0xff]
        %v1440 = vld [vmem:[#allocation15 + $0x190] sm:$0xff]
        %v1441 = vld [vmem:[#allocation15 + $0x198] sm:$0xff]
        %v1442 = vld [vmem:[#allocation15 + $0x1a0] sm:$0xff]
        %v1443 = vld [vmem:[#allocation15 + $0x1a8] sm:$0xff]
        %v1444 = vld [vmem:[#allocation15 + $0x1b0] sm:$0xff]
        %v1445 = vld [vmem:[#allocation15 + $0x1b8] sm:$0xff]
        %v1446 = vld [vmem:[#allocation15 + $0x1c0] sm:$0xff]
        %v1447 = vld [vmem:[#allocation15 + $0x1c8] sm:$0xff]
        %v1448 = vld [vmem:[#allocation15 + $0x1d0] sm:$0xff]
        %v1449 = vld [vmem:[#allocation15 + $0x1d8] sm:$0xff]
        %v1450 = vld [vmem:[#allocation15 + $0x1e0] sm:$0xff]
        %v1451 = vld [vmem:[#allocation15 + $0x1e8] sm:$0xff]
        %v1452 = vld [vmem:[#allocation15 + $0x1f0] sm:$0xff]
        %v1453 = vld [vmem:[#allocation15 + $0x1f8] sm:$0xff]
        %1454 = vmatprep.subr.mxu0 %v1391
        %1455 = vmatpush1.msra.mxu0 %v1390
        %1456 = vmatprep.subr.mxu0 %v1395
        %1457 = vmatpush1.msra.mxu0 %v1394
        %1458 = vmatprep.subr.mxu0 %v1399
        %1459 = vmatpush1.msra.mxu0 %v1398
        %1460 = vmatprep.subr.mxu0 %v1403
        %1461 = vmatpush1.msra.mxu0 %v1402
        %1462 = vmatprep.subr.mxu0 %v1407
        %1463 = vmatpush1.msra.mxu0 %v1406
        %1464 = vmatprep.subr.mxu0 %v1411
        %1465 = vmatpush1.msra.mxu0 %v1410
        %1466 = vmatprep.subr.mxu0 %v1415
        %1467 = vmatpush1.msra.mxu0 %v1414
        %1468 = vmatprep.subr.mxu0 %v1419
        %1469 = vmatpush1.msra.mxu0 %v1418
        %1470 = vmatprep.subr.mxu0 %v1423
        %1471 = vmatpush1.msra.mxu0 %v1422
        %1472 = vmatprep.subr.mxu0 %v1427
        %1473 = vmatpush1.msra.mxu0 %v1426
        %1474 = vmatprep.subr.mxu0 %v1431
        %1475 = vmatpush1.msra.mxu0 %v1430
        %1476 = vmatprep.subr.mxu0 %v1435
        %1477 = vmatpush1.msra.mxu0 %v1434
        %1478 = vmatprep.subr.mxu0 %v1439
        %1479 = vmatpush1.msra.mxu0 %v1438
        %1480 = vmatprep.subr.mxu0 %v1443
        %1481 = vmatpush1.msra.mxu0 %v1442
        %1482 = vmatprep.subr.mxu0 %v1447
        %1483 = vmatpush1.msra.mxu0 %v1446
        %1484 = vmatprep.subr.mxu0 %v1451
        %1485 = vmatpush1.msra.mxu0 %v1450
        %1486 = vmatprep.subr.mxu0 0.0
        %1487 = vmatpush1.msra.mxu0 0.0
        %1488 = vmatprep.subr.mxu0 0.0
        %1489 = vmatpush1.msra.mxu0 0.0
        %1490 = vmatprep.subr.mxu0 0.0
        %1491 = vmatpush1.msra.mxu0 0.0
        %1492 = vmatprep.subr.mxu0 0.0
        %1493 = vmatpush1.msra.mxu0 0.0
        %1494 = vmatprep.subr.mxu0 0.0
        %1495 = vmatpush1.msra.mxu0 0.0
        %1496 = vmatprep.subr.mxu0 0.0
        %1497 = vmatpush1.msra.mxu0 0.0
        %1498 = vmatprep.subr.mxu0 0.0
        %1499 = vmatpush1.msra.mxu0 0.0
        %1500 = vmatprep.subr.mxu0 0.0
        %1501 = vmatpush1.msra.mxu0 0.0
        %1502 = vmatprep.subr.mxu0 0.0
        %1503 = vmatpush1.msra.mxu0 0.0
        %1504 = vmatprep.subr.mxu0 0.0
        %1505 = vmatpush1.msra.mxu0 0.0
        %1506 = vmatprep.subr.mxu0 0.0
        %1507 = vmatpush1.msra.mxu0 0.0
        %1508 = vmatprep.subr.mxu0 0.0
        %1509 = vmatpush1.msra.mxu0 0.0
        %1510 = vmatprep.subr.mxu0 0.0
        %1511 = vmatpush1.msra.mxu0 0.0
        %1512 = vmatprep.subr.mxu0 0.0
        %1513 = vmatpush1.msra.mxu0 0.0
        %1514 = vmatprep.subr.mxu0 0.0
        %1515 = vmatpush1.msra.mxu0 0.0
        %1516 = vmatprep.subr.mxu0 0.0
        %1517 = vmatpush1.msra.mxu0 0.0
        %1518 = vmatprep.mubr.f32.mxu0 0.0
        %1519 = vmatmul.mubr.f32.gmra.mrb[0].mxu0 %v1384
        %v1520 = vpop.f32.mrb[0].mxu0
        %v1521 = vadd.f32 0.0, %v1520
        %v1522 = vpop.f32.mrb[0].mxu0
        %v1523 = vadd.f32 0.0, %v1522
        %1524 = vdwg.mxu0
        %1525 = vmatprep.subr.mxu0 %v1393
        %1526 = vmatpush1.msra.mxu0 %v1392
        %1527 = vmatprep.subr.mxu0 %v1397
        %1528 = vmatpush1.msra.mxu0 %v1396
        %1529 = vmatprep.subr.mxu0 %v1401
        %1530 = vmatpush1.msra.mxu0 %v1400
        %1531 = vmatprep.subr.mxu0 %v1405
        %1532 = vmatpush1.msra.mxu0 %v1404
        %1533 = vmatprep.subr.mxu0 %v1409
        %1534 = vmatpush1.msra.mxu0 %v1408
        %1535 = vmatprep.subr.mxu0 %v1413
        %1536 = vmatpush1.msra.mxu0 %v1412
        %1537 = vmatprep.subr.mxu0 %v1417
        %1538 = vmatpush1.msra.mxu0 %v1416
        %1539 = vmatprep.subr.mxu0 %v1421
        %1540 = vmatpush1.msra.mxu0 %v1420
        %1541 = vmatprep.subr.mxu0 %v1425
        %1542 = vmatpush1.msra.mxu0 %v1424
        %1543 = vmatprep.subr.mxu0 %v1429
        %1544 = vmatpush1.msra.mxu0 %v1428
        %1545 = vmatprep.subr.mxu0 %v1433
        %1546 = vmatpush1.msra.mxu0 %v1432
        %1547 = vmatprep.subr.mxu0 %v1437
        %1548 = vmatpush1.msra.mxu0 %v1436
        %1549 = vmatprep.subr.mxu0 %v1441
        %1550 = vmatpush1.msra.mxu0 %v1440
        %1551 = vmatprep.subr.mxu0 %v1445
        %1552 = vmatpush1.msra.mxu0 %v1444
        %1553 = vmatprep.subr.mxu0 %v1449
        %1554 = vmatpush1.msra.mxu0 %v1448
        %1555 = vmatprep.subr.mxu0 %v1453
        %1556 = vmatpush1.msra.mxu0 %v1452
        %1557 = vmatprep.subr.mxu0 0.0
        %1558 = vmatpush1.msra.mxu0 0.0
        %1559 = vmatprep.subr.mxu0 0.0
        %1560 = vmatpush1.msra.mxu0 0.0
        %1561 = vmatprep.subr.mxu0 0.0
        %1562 = vmatpush1.msra.mxu0 0.0
        %1563 = vmatprep.subr.mxu0 0.0
        %1564 = vmatpush1.msra.mxu0 0.0
        %1565 = vmatprep.subr.mxu0 0.0
        %1566 = vmatpush1.msra.mxu0 0.0
        %1567 = vmatprep.subr.mxu0 0.0
        %1568 = vmatpush1.msra.mxu0 0.0
        %1569 = vmatprep.subr.mxu0 0.0
        %1570 = vmatpush1.msra.mxu0 0.0
        %1571 = vmatprep.subr.mxu0 0.0
        %1572 = vmatpush1.msra.mxu0 0.0
        %1573 = vmatprep.subr.mxu0 0.0
        %1574 = vmatpush1.msra.mxu0 0.0
        %1575 = vmatprep.subr.mxu0 0.0
        %1576 = vmatpush1.msra.mxu0 0.0
        %1577 = vmatprep.subr.mxu0 0.0
        %1578 = vmatpush1.msra.mxu0 0.0
        %1579 = vmatprep.subr.mxu0 0.0
        %1580 = vmatpush1.msra.mxu0 0.0
        %1581 = vmatprep.subr.mxu0 0.0
        %1582 = vmatpush1.msra.mxu0 0.0
        %1583 = vmatprep.subr.mxu0 0.0
        %1584 = vmatpush1.msra.mxu0 0.0
        %1585 = vmatprep.subr.mxu0 0.0
        %1586 = vmatpush1.msra.mxu0 0.0
        %1587 = vmatprep.subr.mxu0 0.0
        %1588 = vmatpush1.msra.mxu0 0.0
        %1589 = vmatprep.mubr.f32.mxu0 0.0
        %1590 = vmatmul.mubr.f32.gmra.mrb[0].mxu0 %v1384
        %v1591 = vpop.f32.mrb[0].mxu0
        %v1592 = vadd.f32 0.0, %v1591
        %v1593 = vpop.f32.mrb[0].mxu0
        %v1594 = vadd.f32 0.0, %v1593
        %1595 = vdwg.mxu0
        %v1596 = vadd.f32 %v1386, %v1521
        %v1597 = vadd.f32 %v1387, %v1523
        %v1598 = vadd.f32 %v1388, %v1592
        %v1599 = vadd.f32 %v1389, %v1594
        %v1600 = vxor.u32 %v1596, 2147483648
        %v1601 = vxor.u32 %v1597, 2147483648
        %v1602 = vxor.u32 %v1598, 2147483648
        %v1603 = vmul.f32 %v1600, 1.442695
        %v1604 = vpow.pop %v1603
        %v1605 = vmul.f32 %v1601, 1.442695
        %v1606 = vpow.pop %v1605
        %v1607 = vmul.f32 %v1602, 1.442695
        %v1608 = vpow.pop %v1607
        %v1609 = vadd.f32 %v1604, 1.0
        %v1610 = vadd.f32 %v1606, 1.0
        %v1611 = vadd.f32 %v1608, 1.0
        %v1612 = vrcp.pop %v1609
        %v1613 = vmul.f32 1.0, %v1612
        %v1614 = vrcp.pop %v1610
        %v1615 = vmul.f32 1.0, %v1614
        %v1616 = vrcp.pop %v1611
        %v1617 = vmul.f32 1.0, %v1616
        %v1618 = vtanh.pop %v1599
        %v1619 = vmul.f32 %v1615, %v1382
        %v1620 = vmul.f32 %v1613, %v1618
        %v1621 = vadd.f32 %v1619, %v1620
        %v1622 = vtanh.pop %v1621
        %v1623 = vmul.f32 %v1617, %v1622
        %1624 = vst [vmem:[#allocation3 + $0x10] sm:$0xff] %v1623
        %v1625 = vld [vmem:[#allocation2 + $0x60] sm:$0xff]
        %v1626 = vld [vmem:[#allocation2 + $0x68] sm:$0xff]
        %v1627 = vld [vmem:[#allocation2 + $0x70] sm:$0xff]
        %v1628 = vld [vmem:[#allocation2 + $0x78] sm:$0xff]
        %v1629 = vld [vmem:[#allocation15] sm:$0xff]
        %v1630 = vld [vmem:[#allocation15 + $0x8] sm:$0xff]
        %v1631 = vld [vmem:[#allocation15 + $0x10] sm:$0xff]
        %v1632 = vld [vmem:[#allocation15 + $0x18] sm:$0xff]
        %v1633 = vld [vmem:[#allocation15 + $0x20] sm:$0xff]
        %v1634 = vld [vmem:[#allocation15 + $0x28] sm:$0xff]
        %v1635 = vld [vmem:[#allocation15 + $0x30] sm:$0xff]
        %v1636 = vld [vmem:[#allocation15 + $0x38] sm:$0xff]
        %v1637 = vld [vmem:[#allocation15 + $0x40] sm:$0xff]
        %v1638 = vld [vmem:[#allocation15 + $0x48] sm:$0xff]
        %v1639 = vld [vmem:[#allocation15 + $0x50] sm:$0xff]
        %v1640 = vld [vmem:[#allocation15 + $0x58] sm:$0xff]
        %v1641 = vld [vmem:[#allocation15 + $0x60] sm:$0xff]
        %v1642 = vld [vmem:[#allocation15 + $0x68] sm:$0xff]
        %v1643 = vld [vmem:[#allocation15 + $0x70] sm:$0xff]
        %v1644 = vld [vmem:[#allocation15 + $0x78] sm:$0xff]
        %v1645 = vld [vmem:[#allocation15 + $0x80] sm:$0xff]
        %v1646 = vld [vmem:[#allocation15 + $0x88] sm:$0xff]
        %v1647 = vld [vmem:[#allocation15 + $0x90] sm:$0xff]
        %v1648 = vld [vmem:[#allocation15 + $0x98] sm:$0xff]
        %v1649 = vld [vmem:[#allocation15 + $0xa0] sm:$0xff]
        %v1650 = vld [vmem:[#allocation15 + $0xa8] sm:$0xff]
        %v1651 = vld [vmem:[#allocation15 + $0xb0] sm:$0xff]
        %v1652 = vld [vmem:[#allocation15 + $0xb8] sm:$0xff]
        %v1653 = vld [vmem:[#allocation15 + $0xc0] sm:$0xff]
        %v1654 = vld [vmem:[#allocation15 + $0xc8] sm:$0xff]
        %v1655 = vld [vmem:[#allocation15 + $0xd0] sm:$0xff]
        %v1656 = vld [vmem:[#allocation15 + $0xd8] sm:$0xff]
        %v1657 = vld [vmem:[#allocation15 + $0xe0] sm:$0xff]
        %v1658 = vld [vmem:[#allocation15 + $0xe8] sm:$0xff]
        %v1659 = vld [vmem:[#allocation15 + $0xf0] sm:$0xff]
        %v1660 = vld [vmem:[#allocation15 + $0xf8] sm:$0xff]
        %v1661 = vld [vmem:[#allocation15 + $0x100] sm:$0xff]
        %v1662 = vld [vmem:[#allocation15 + $0x108] sm:$0xff]
        %v1663 = vld [vmem:[#allocation15 + $0x110] sm:$0xff]
        %v1664 = vld [vmem:[#allocation15 + $0x118] sm:$0xff]
        %v1665 = vld [vmem:[#allocation15 + $0x120] sm:$0xff]
        %v1666 = vld [vmem:[#allocation15 + $0x128] sm:$0xff]
        %v1667 = vld [vmem:[#allocation15 + $0x130] sm:$0xff]
        %v1668 = vld [vmem:[#allocation15 + $0x138] sm:$0xff]
        %v1669 = vld [vmem:[#allocation15 + $0x140] sm:$0xff]
        %v1670 = vld [vmem:[#allocation15 + $0x148] sm:$0xff]
        %v1671 = vld [vmem:[#allocation15 + $0x150] sm:$0xff]
        %v1672 = vld [vmem:[#allocation15 + $0x158] sm:$0xff]
        %v1673 = vld [vmem:[#allocation15 + $0x160] sm:$0xff]
        %v1674 = vld [vmem:[#allocation15 + $0x168] sm:$0xff]
        %v1675 = vld [vmem:[#allocation15 + $0x170] sm:$0xff]
        %v1676 = vld [vmem:[#allocation15 + $0x178] sm:$0xff]
        %v1677 = vld [vmem:[#allocation15 + $0x180] sm:$0xff]
        %v1678 = vld [vmem:[#allocation15 + $0x188] sm:$0xff]
        %v1679 = vld [vmem:[#allocation15 + $0x190] sm:$0xff]
        %v1680 = vld [vmem:[#allocation15 + $0x198] sm:$0xff]
        %v1681 = vld [vmem:[#allocation15 + $0x1a0] sm:$0xff]
        %v1682 = vld [vmem:[#allocation15 + $0x1a8] sm:$0xff]
        %v1683 = vld [vmem:[#allocation15 + $0x1b0] sm:$0xff]
        %v1684 = vld [vmem:[#allocation15 + $0x1b8] sm:$0xff]
        %v1685 = vld [vmem:[#allocation15 + $0x1c0] sm:$0xff]
        %v1686 = vld [vmem:[#allocation15 + $0x1c8] sm:$0xff]
        %v1687 = vld [vmem:[#allocation15 + $0x1d0] sm:$0xff]
        %v1688 = vld [vmem:[#allocation15 + $0x1d8] sm:$0xff]
        %v1689 = vld [vmem:[#allocation15 + $0x1e0] sm:$0xff]
        %v1690 = vld [vmem:[#allocation15 + $0x1e8] sm:$0xff]
        %v1691 = vld [vmem:[#allocation15 + $0x1f0] sm:$0xff]
        %v1692 = vld [vmem:[#allocation15 + $0x1f8] sm:$0xff]
        %1693 = vmatprep.subr.mxu0 %v1630
        %1694 = vmatpush1.msra.mxu0 %v1629
        %1695 = vmatprep.subr.mxu0 %v1634
        %1696 = vmatpush1.msra.mxu0 %v1633
        %1697 = vmatprep.subr.mxu0 %v1638
        %1698 = vmatpush1.msra.mxu0 %v1637
        %1699 = vmatprep.subr.mxu0 %v1642
        %1700 = vmatpush1.msra.mxu0 %v1641
        %1701 = vmatprep.subr.mxu0 %v1646
        %1702 = vmatpush1.msra.mxu0 %v1645
        %1703 = vmatprep.subr.mxu0 %v1650
        %1704 = vmatpush1.msra.mxu0 %v1649
        %1705 = vmatprep.subr.mxu0 %v1654
        %1706 = vmatpush1.msra.mxu0 %v1653
        %1707 = vmatprep.subr.mxu0 %v1658
        %1708 = vmatpush1.msra.mxu0 %v1657
        %1709 = vmatprep.subr.mxu0 %v1662
        %1710 = vmatpush1.msra.mxu0 %v1661
        %1711 = vmatprep.subr.mxu0 %v1666
        %1712 = vmatpush1.msra.mxu0 %v1665
        %1713 = vmatprep.subr.mxu0 %v1670
        %1714 = vmatpush1.msra.mxu0 %v1669
        %1715 = vmatprep.subr.mxu0 %v1674
        %1716 = vmatpush1.msra.mxu0 %v1673
        %1717 = vmatprep.subr.mxu0 %v1678
        %1718 = vmatpush1.msra.mxu0 %v1677
        %1719 = vmatprep.subr.mxu0 %v1682
        %1720 = vmatpush1.msra.mxu0 %v1681
        %1721 = vmatprep.subr.mxu0 %v1686
        %1722 = vmatpush1.msra.mxu0 %v1685
        %1723 = vmatprep.subr.mxu0 %v1690
        %1724 = vmatpush1.msra.mxu0 %v1689
        %1725 = vmatprep.subr.mxu0 0.0
        %1726 = vmatpush1.msra.mxu0 0.0
        %1727 = vmatprep.subr.mxu0 0.0
        %1728 = vmatpush1.msra.mxu0 0.0
        %1729 = vmatprep.subr.mxu0 0.0
        %1730 = vmatpush1.msra.mxu0 0.0
        %1731 = vmatprep.subr.mxu0 0.0
        %1732 = vmatpush1.msra.mxu0 0.0
        %1733 = vmatprep.subr.mxu0 0.0
        %1734 = vmatpush1.msra.mxu0 0.0
        %1735 = vmatprep.subr.mxu0 0.0
        %1736 = vmatpush1.msra.mxu0 0.0
        %1737 = vmatprep.subr.mxu0 0.0
        %1738 = vmatpush1.msra.mxu0 0.0
        %1739 = vmatprep.subr.mxu0 0.0
        %1740 = vmatpush1.msra.mxu0 0.0
        %1741 = vmatprep.subr.mxu0 0.0
        %1742 = vmatpush1.msra.mxu0 0.0
        %1743 = vmatprep.subr.mxu0 0.0
        %1744 = vmatpush1.msra.mxu0 0.0
        %1745 = vmatprep.subr.mxu0 0.0
        %1746 = vmatpush1.msra.mxu0 0.0
        %1747 = vmatprep.subr.mxu0 0.0
        %1748 = vmatpush1.msra.mxu0 0.0
        %1749 = vmatprep.subr.mxu0 0.0
        %1750 = vmatpush1.msra.mxu0 0.0
        %1751 = vmatprep.subr.mxu0 0.0
        %1752 = vmatpush1.msra.mxu0 0.0
        %1753 = vmatprep.subr.mxu0 0.0
        %1754 = vmatpush1.msra.mxu0 0.0
        %1755 = vmatprep.subr.mxu0 0.0
        %1756 = vmatpush1.msra.mxu0 0.0
        %1757 = vmatprep.mubr.f32.mxu0 0.0
        %1758 = vmatmul.mubr.f32.gmra.mrb[0].mxu0 %v1623
        %v1759 = vpop.f32.mrb[0].mxu0
        %v1760 = vadd.f32 0.0, %v1759
        %v1761 = vpop.f32.mrb[0].mxu0
        %v1762 = vadd.f32 0.0, %v1761
        %1763 = vdwg.mxu0
        %1764 = vmatprep.subr.mxu0 %v1632
        %1765 = vmatpush1.msra.mxu0 %v1631
        %1766 = vmatprep.subr.mxu0 %v1636
        %1767 = vmatpush1.msra.mxu0 %v1635
        %1768 = vmatprep.subr.mxu0 %v1640
        %1769 = vmatpush1.msra.mxu0 %v1639
        %1770 = vmatprep.subr.mxu0 %v1644
        %1771 = vmatpush1.msra.mxu0 %v1643
        %1772 = vmatprep.subr.mxu0 %v1648
        %1773 = vmatpush1.msra.mxu0 %v1647
        %1774 = vmatprep.subr.mxu0 %v1652
        %1775 = vmatpush1.msra.mxu0 %v1651
        %1776 = vmatprep.subr.mxu0 %v1656
        %1777 = vmatpush1.msra.mxu0 %v1655
        %1778 = vmatprep.subr.mxu0 %v1660
        %1779 = vmatpush1.msra.mxu0 %v1659
        %1780 = vmatprep.subr.mxu0 %v1664
        %1781 = vmatpush1.msra.mxu0 %v1663
        %1782 = vmatprep.subr.mxu0 %v1668
        %1783 = vmatpush1.msra.mxu0 %v1667
        %1784 = vmatprep.subr.mxu0 %v1672
        %1785 = vmatpush1.msra.mxu0 %v1671
        %1786 = vmatprep.subr.mxu0 %v1676
        %1787 = vmatpush1.msra.mxu0 %v1675
        %1788 = vmatprep.subr.mxu0 %v1680
        %1789 = vmatpush1.msra.mxu0 %v1679
        %1790 = vmatprep.subr.mxu0 %v1684
        %1791 = vmatpush1.msra.mxu0 %v1683
        %1792 = vmatprep.subr.mxu0 %v1688
        %1793 = vmatpush1.msra.mxu0 %v1687
        %1794 = vmatprep.subr.mxu0 %v1692
        %1795 = vmatpush1.msra.mxu0 %v1691
        %1796 = vmatprep.subr.mxu0 0.0
        %1797 = vmatpush1.msra.mxu0 0.0
        %1798 = vmatprep.subr.mxu0 0.0
        %1799 = vmatpush1.msra.mxu0 0.0
        %1800 = vmatprep.subr.mxu0 0.0
        %1801 = vmatpush1.msra.mxu0 0.0
        %1802 = vmatprep.subr.mxu0 0.0
        %1803 = vmatpush1.msra.mxu0 0.0
        %1804 = vmatprep.subr.mxu0 0.0
        %1805 = vmatpush1.msra.mxu0 0.0
        %1806 = vmatprep.subr.mxu0 0.0
        %1807 = vmatpush1.msra.mxu0 0.0
        %1808 = vmatprep.subr.mxu0 0.0
        %1809 = vmatpush1.msra.mxu0 0.0
        %1810 = vmatprep.subr.mxu0 0.0
        %1811 = vmatpush1.msra.mxu0 0.0
        %1812 = vmatprep.subr.mxu0 0.0
        %1813 = vmatpush1.msra.mxu0 0.0
        %1814 = vmatprep.subr.mxu0 0.0
        %1815 = vmatpush1.msra.mxu0 0.0
        %1816 = vmatprep.subr.mxu0 0.0
        %1817 = vmatpush1.msra.mxu0 0.0
        %1818 = vmatprep.subr.mxu0 0.0
        %1819 = vmatpush1.msra.mxu0 0.0
        %1820 = vmatprep.subr.mxu0 0.0
        %1821 = vmatpush1.msra.mxu0 0.0
        %1822 = vmatprep.subr.mxu0 0.0
        %1823 = vmatpush1.msra.mxu0 0.0
        %1824 = vmatprep.subr.mxu0 0.0
        %1825 = vmatpush1.msra.mxu0 0.0
        %1826 = vmatprep.subr.mxu0 0.0
        %1827 = vmatpush1.msra.mxu0 0.0
        %1828 = vmatprep.mubr.f32.mxu0 0.0
        %1829 = vmatmul.mubr.f32.gmra.mrb[0].mxu0 %v1623
        %v1830 = vpop.f32.mrb[0].mxu0
        %v1831 = vadd.f32 0.0, %v1830
        %v1832 = vpop.f32.mrb[0].mxu0
        %v1833 = vadd.f32 0.0, %v1832
        %1834 = vdwg.mxu0
        %v1835 = vadd.f32 %v1625, %v1760
        %v1836 = vadd.f32 %v1626, %v1762
        %v1837 = vadd.f32 %v1627, %v1831
        %v1838 = vadd.f32 %v1628, %v1833
        %v1839 = vxor.u32 %v1835, 2147483648
        %v1840 = vxor.u32 %v1836, 2147483648
        %v1841 = vxor.u32 %v1837, 2147483648
        %v1842 = vmul.f32 %v1839, 1.442695
        %v1843 = vpow.pop %v1842
        %v1844 = vmul.f32 %v1840, 1.442695
        %v1845 = vpow.pop %v1844
        %v1846 = vmul.f32 %v1841, 1.442695
        %v1847 = vpow.pop %v1846
        %v1848 = vadd.f32 %v1843, 1.0
        %v1849 = vadd.f32 %v1845, 1.0
        %v1850 = vadd.f32 %v1847, 1.0
        %v1851 = vrcp.pop %v1848
        %v1852 = vmul.f32 1.0, %v1851
        %v1853 = vrcp.pop %v1849
        %v1854 = vmul.f32 1.0, %v1853
        %v1855 = vrcp.pop %v1850
        %v1856 = vmul.f32 1.0, %v1855
        %v1857 = vtanh.pop %v1838
        %v1858 = vmul.f32 %v1854, %v1621
        %v1859 = vmul.f32 %v1852, %v1857
        %v1860 = vadd.f32 %v1858, %v1859
        %v1861 = vtanh.pop %v1860
        %v1862 = vmul.f32 %v1856, %v1861
        %1863 = vst [vmem:[#allocation3 + $0x18] sm:$0xff] %v1862
        %1864 = vst [vmem:[#allocation4] sm:$0xff] %v1862
        %1865 = vst [vmem:[#allocation5] sm:$0xff] %v1860
        %v1866 = vld [vmem:[#allocation3] sm:$0xff]
        %v1867 = vld [vmem:[#allocation3 + $0x8] sm:$0xff]
        %v1868 = vld [vmem:[#allocation3 + $0x10] sm:$0xff]
        %v1869 = vld [vmem:[#allocation3 + $0x18] sm:$0xff]
        %v1870 = vld [vmem:[#allocation17] sm:$0xff]
        %v1871 = vld [vmem:[#allocation17 + $0x8] sm:$0xff]
        %v1872 = vld [vmem:[#allocation17 + $0x10] sm:$0xff]
        %v1873 = vld [vmem:[#allocation17 + $0x18] sm:$0xff]
        %v1874 = vld [vmem:[#allocation17 + $0x20] sm:$0xff]
        %v1875 = vld [vmem:[#allocation17 + $0x28] sm:$0xff]
        %v1876 = vld [vmem:[#allocation17 + $0x30] sm:$0xff]
        %v1877 = vld [vmem:[#allocation17 + $0x38] sm:$0xff]
        %v1878 = vld [vmem:[#allocation17 + $0x40] sm:$0xff]
        %v1879 = vld [vmem:[#allocation17 + $0x48] sm:$0xff]
        %v1880 = vld [vmem:[#allocation17 + $0x50] sm:$0xff]
        %v1881 = vld [vmem:[#allocation17 + $0x58] sm:$0xff]
        %v1882 = vld [vmem:[#allocation17 + $0x60] sm:$0xff]
        %v1883 = vld [vmem:[#allocation17 + $0x68] sm:$0xff]
        %v1884 = vld [vmem:[#allocation17 + $0x70] sm:$0xff]
        %v1885 = vld [vmem:[#allocation17 + $0x78] sm:$0xff]
        %v1886 = vld [vmem:[%s9] sm:$0x1]
        %v1888 = vlaneseq
        %v1889 = vshrl.u32 %v1888, 7
        %v1890 = vsub.s32 0, %v1889
        %v1891 = vrot.slane %v1886, %v1890
        %1893 = vmatprep.subr.mxu0 0.0
        %1894 = vmatpush1.msra.mxu0 %v1870
        %1895 = vmatprep.subr.mxu0 0.0
        %1896 = vmatpush1.msra.mxu0 %v1871
        %1897 = vmatprep.subr.mxu0 0.0
        %1898 = vmatpush1.msra.mxu0 %v1872
        %1899 = vmatprep.subr.mxu0 0.0
        %1900 = vmatpush1.msra.mxu0 %v1873
        %1901 = vmatprep.subr.mxu0 0.0
        %1902 = vmatpush1.msra.mxu0 %v1874
        %1903 = vmatprep.subr.mxu0 0.0
        %1904 = vmatpush1.msra.mxu0 %v1875
        %1905 = vmatprep.subr.mxu0 0.0
        %1906 = vmatpush1.msra.mxu0 %v1876
        %1907 = vmatprep.subr.mxu0 0.0
        %1908 = vmatpush1.msra.mxu0 %v1877
        %1909 = vmatprep.subr.mxu0 0.0
        %1910 = vmatpush1.msra.mxu0 %v1878
        %1911 = vmatprep.subr.mxu0 0.0
        %1912 = vmatpush1.msra.mxu0 %v1879
        %1913 = vmatprep.subr.mxu0 0.0
        %1914 = vmatpush1.msra.mxu0 %v1880
        %1915 = vmatprep.subr.mxu0 0.0
        %1916 = vmatpush1.msra.mxu0 %v1881
        %1917 = vmatprep.subr.mxu0 0.0
        %1918 = vmatpush1.msra.mxu0 %v1882
        %1919 = vmatprep.subr.mxu0 0.0
        %1920 = vmatpush1.msra.mxu0 %v1883
        %1921 = vmatprep.subr.mxu0 0.0
        %1922 = vmatpush1.msra.mxu0 %v1884
        %1923 = vmatprep.subr.mxu0 0.0
        %1924 = vmatpush1.msra.mxu0 %v1885
        %1925 = vmatprep.subr.mxu0 0.0
        %1926 = vmatpush1.msra.mxu0 0.0
        %1927 = vmatprep.subr.mxu0 0.0
        %1928 = vmatpush1.msra.mxu0 0.0
        %1929 = vmatprep.subr.mxu0 0.0
        %1930 = vmatpush1.msra.mxu0 0.0
        %1931 = vmatprep.subr.mxu0 0.0
        %1932 = vmatpush1.msra.mxu0 0.0
        %1933 = vmatprep.subr.mxu0 0.0
        %1934 = vmatpush1.msra.mxu0 0.0
        %1935 = vmatprep.subr.mxu0 0.0
        %1936 = vmatpush1.msra.mxu0 0.0
        %1937 = vmatprep.subr.mxu0 0.0
        %1938 = vmatpush1.msra.mxu0 0.0
        %1939 = vmatprep.subr.mxu0 0.0
        %1940 = vmatpush1.msra.mxu0 0.0
        %1941 = vmatprep.subr.mxu0 0.0
        %1942 = vmatpush1.msra.mxu0 0.0
        %1943 = vmatprep.subr.mxu0 0.0
        %1944 = vmatpush1.msra.mxu0 0.0
        %1945 = vmatprep.subr.mxu0 0.0
        %1946 = vmatpush1.msra.mxu0 0.0
        %1947 = vmatprep.subr.mxu0 0.0
        %1948 = vmatpush1.msra.mxu0 0.0
        %1949 = vmatprep.subr.mxu0 0.0
        %1950 = vmatpush1.msra.mxu0 0.0
        %1951 = vmatprep.subr.mxu0 0.0
        %1952 = vmatpush1.msra.mxu0 0.0
        %1953 = vmatprep.subr.mxu0 0.0
        %1954 = vmatpush1.msra.mxu0 0.0
        %1955 = vmatprep.subr.mxu0 0.0
        %1956 = vmatpush1.msra.mxu0 0.0
        %1957 = vmatprep.mubr.f32.mxu0 0.0
        %1958 = vmatmul.mubr.f32.gmra.mrb[0].mxu0 %v1866
        %v1959 = vpop.f32.mrb[0].mxu0
        %v1960 = vadd.f32 %v1891, %v1959
        %v1961 = vpop.f32.mrb[0].mxu0
        %1962 = vmatprep.mubr.f32.mxu0 0.0
        %1963 = vmatmul.mubr.f32.gmra.mrb[0].mxu0 %v1867
        %v1964 = vpop.f32.mrb[0].mxu0
        %v1965 = vadd.f32 %v1891, %v1964
        %v1966 = vpop.f32.mrb[0].mxu0
        %1967 = vmatprep.mubr.f32.mxu0 0.0
        %1968 = vmatmul.mubr.f32.gmra.mrb[0].mxu0 %v1868
        %v1969 = vpop.f32.mrb[0].mxu0
        %v1970 = vadd.f32 %v1891, %v1969
        %v1971 = vpop.f32.mrb[0].mxu0
        %1972 = vmatprep.mubr.f32.mxu0 0.0
        %1973 = vmatmul.mubr.f32.gmra.mrb[0].mxu0 %v1869
        %v1974 = vpop.f32.mrb[0].mxu0
        %v1975 = vadd.f32 %v1891, %v1974
        %v1976 = vpop.f32.mrb[0].mxu0
        %1977 = vdwg.mxu0
        %1978 = vmax.xlane.f32.xlu0 %v1960
        %v1979 = vpop.xlane.xlu0 %1978
        %1980 = vmax.xlane.f32.xlu0 %v1965
        %v1981 = vpop.xlane.xlu0 %1980
        %1982 = vmax.xlane.f32.xlu0 %v1970
        %v1983 = vpop.xlane.xlu0 %1982
        %1984 = vmax.xlane.f32.xlu0 %v1975
        %v1985 = vpop.xlane.xlu0 %1984
        %v1986 = vsub.f32 %v1960, %v1979
        %v1987 = vsub.f32 %v1965, %v1981
        %v1988 = vsub.f32 %v1970, %v1983
        %v1989 = vsub.f32 %v1975, %v1985
        %v1990 = vmul.f32 %v1986, 1.442695
        %v1991 = vpow.pop %v1990
        %v1992 = vmul.f32 %v1987, 1.442695
        %v1993 = vpow.pop %v1992
        %v1994 = vmul.f32 %v1988, 1.442695
        %v1995 = vpow.pop %v1994
        %v1996 = vmul.f32 %v1989, 1.442695
        %v1997 = vpow.pop %v1996
        %1998 = vadd.xlane.f32.xlu0 %v1991
        %v1999 = vpop.xlane.xlu0 %1998
        %2000 = vadd.xlane.f32.xlu0 %v1993
        %v2001 = vpop.xlane.xlu0 %2000
        %2002 = vadd.xlane.f32.xlu0 %v1995
        %v2003 = vpop.xlane.xlu0 %2002
        %2004 = vadd.xlane.f32.xlu0 %v1997
        %v2005 = vpop.xlane.xlu0 %2004
        %v2006 = vrcp.pop %v1999
        %v2007 = vmul.f32 %v1991, %v2006
        %v2008 = vrcp.pop %v2001
        %v2009 = vmul.f32 %v1993, %v2008
        %v2010 = vrcp.pop %v2003
        %v2011 = vmul.f32 %v1995, %v2010
        %v2012 = vrcp.pop %v2005
        %v2013 = vmul.f32 %v1997, %v2012
        %vm2014 = vcmp.eq.f32.partialorder %v2007, 0.0
        %vm2015 = vcmp.eq.f32.partialorder %v2009, 0.0
        %vm2016 = vcmp.eq.f32.partialorder %v2011, 0.0
        %vm2017 = vcmp.eq.f32.partialorder %v2013, 0.0
        %v2018 = vsel %vm2014, 1e-08, 0.0
        %v2019 = vsel %vm2015, 1e-08, 0.0
        %v2020 = vsel %vm2016, 1e-08, 0.0
        %v2021 = vsel %vm2017, 1e-08, 0.0
        %v2022 = vadd.f32 %v2007, %v2018
        %v2023 = vadd.f32 %v2009, %v2019
        %v2024 = vadd.f32 %v2011, %v2020
        %v2025 = vadd.f32 %v2013, %v2021
        %v2026 = vlog2.pop %v2022
        %v2027 = vmul.f32 %v2026, 0.6931472
        %v2028 = vlog2.pop %v2023
        %v2029 = vmul.f32 %v2028, 0.6931472
        %v2030 = vlog2.pop %v2024
        %v2031 = vmul.f32 %v2030, 0.6931472
        %v2032 = vlog2.pop %v2025
        %v2033 = vmul.f32 %v2032, 0.6931472
        %2034 = vst [vmem:[%s491] sm:$0xff] %v2007
        %2035 = vst [vmem:[%s491 + $0x8] sm:$0xff] %v2009
        %2036 = vst [vmem:[%s491 + $0x10] sm:$0xff] %v2011
        %2037 = vst [vmem:[%s491 + $0x18] sm:$0xff] %v2013
        %2038 = vst [vmem:[%s498] sm:$0xff] %v2027
        %2039 = vst [vmem:[%s498 + $0x8] sm:$0xff] %v2029
        %2040 = vst [vmem:[%s498 + $0x10] sm:$0xff] %v2031
        %2041 = vst [vmem:[%s498 + $0x18] sm:$0xff] %v2033
        %s2042 = sand.u32 %s258, 1
        %s2043 = scalar_lea.sflag [#allocation8], %s2042
        %s2044 = sand.u32 %s258, 1
        %s2045 = smul.addr %s2044, 32
        %s2046 = scalar_lea.vmem [#allocation18], %s2045
        %s2047 = sand.u32 %s284, 1
        %s2048 = scalar_lea.sflag [#allocation20], %s2047
        %s2049 = sand.u32 %s284, 1
        %s2050 = smul.addr %s2049, 32
        %s2051 = scalar_lea.vmem [#allocation19], %s2050
        // Predicated region
        $region93: #{tpu_custom_call.1} parent=59 // pred_check
          %p2052 = pneg %p268
        $region94: #{tpu_custom_call.1} parent=59 // pred_check_branch
          %2054 = sbr.rel (%p2052) target = $region96
        $region95: #{tpu_custom_call.1} parent=59 // pred_region
          %s2055 = smul.u32 4, %s35
          %s2057 = ssub.s32 512, 512
          %2058 = vsyncadd %s2043, %s2057
          %s2059 = smul.addr %s2055, 128
          %s2060 = scalar_lea.hbm %s10, %s2059
          %s2061 = sshll.u32 %s2046, 4
          %s2062 = int_to_ptr.vmem [resolvable:$true] %s2061
          %2067 = dma.vmem_to_hbm [thread:$0]  %s2062, 512, %s2060, %s2043, 128, 128, 8
        $region96: #{tpu_custom_call.1} parent=59 // pred_fallthru
          _
        // Predicated region
        $region97: #{tpu_custom_call.1} parent=59 // pred_check
          %p2068 = pneg %p294
        $region98: #{tpu_custom_call.1} parent=59 // pred_check_branch
          %2070 = sbr.rel (%p2068) target = $region100
        $region99: #{tpu_custom_call.1} parent=59 // pred_region
          %s2071 = smul.u32 4, %s35
          %s2073 = ssub.s32 512, 512
          %2074 = vsyncadd %s2048, %s2073
          %s2075 = smul.addr %s2071, 128
          %s2076 = scalar_lea.hbm %s11, %s2075
          %s2077 = sshll.u32 %s2051, 4
          %s2078 = int_to_ptr.vmem [resolvable:$true] %s2077
          %2083 = dma.vmem_to_hbm [thread:$0]  %s2078, 512, %s2076, %s2048, 128, 128, 8
        $region100: #{tpu_custom_call.1} parent=59 // pred_fallthru
          _
      $region60: #{tpu_custom_call.1} parent=5 // pred_fallthru
        _
      %p2084 = scmp.le.s32.totalorder 2, %s30
      // Predicated region
      $region101: #{tpu_custom_call.1} parent=5 // pred_check
        %p2085 = pneg %p2084
      $region102: #{tpu_custom_call.1} parent=5 // pred_check_branch
        %2087 = sbr.rel (%p2085) target = $region104
      $region103: #{tpu_custom_call.1} parent=5 // pred_region
        %s2088 = ssub.s32 %s30, 2
        // Predicated region
        $region105: #{tpu_custom_call.1} parent=103 // pred_check
          %p2089 = pneg %p274
        $region106: #{tpu_custom_call.1} parent=103 // pred_check_branch
          %2091 = sbr.rel (%p2089) target = $region108
        $region107: #{tpu_custom_call.1} parent=103 // pred_region
          %s2092 = sand.u32 %s259, 1
          %s2093 = scalar_lea.sflag [#allocation8], %s2092
          %s2094 = sand.u32 %s259, 1
          %s2095 = smul.addr %s2094, 32
          %s2096 = scalar_lea.vmem [#allocation18], %s2095
          %2097 = dma.done %s2093, 512
        $region108: #{tpu_custom_call.1} parent=103 // pred_fallthru
          _
        // Predicated region
        $region109: #{tpu_custom_call.1} parent=103 // pred_check
          %p2098 = pneg %p300
        $region110: #{tpu_custom_call.1} parent=103 // pred_check_branch
          %2100 = sbr.rel (%p2098) target = $region112
        $region111: #{tpu_custom_call.1} parent=103 // pred_region
          %s2101 = sand.u32 %s285, 1
          %s2102 = scalar_lea.sflag [#allocation20], %s2101
          %s2103 = sand.u32 %s285, 1
          %s2104 = smul.addr %s2103, 32
          %s2105 = scalar_lea.vmem [#allocation19], %s2104
          %2106 = dma.done %s2102, 512
        $region112: #{tpu_custom_call.1} parent=103 // pred_fallthru
          _
      $region104: #{tpu_custom_call.1} parent=5 // pred_fallthru
        _
    $region6: #{tpu_custom_call.1} parent=1 // loop_footer
      %s34 = sadd.s32 1, %s30
    $region7: #{tpu_custom_call.1} parent=1 // loop_footer_branch
      %29 = sbr.rel target = $region3
    $region8: #{tpu_custom_call.1} parent=1 // loop_exit
      _
    %2107 = vsyncpa [#allocation7], 1
    %s2108 = scalar_lea.sflag [#allocation7], 1
    %2109 = vsyncpa %s2108, 1
    %2110 = vsyncpa [#allocation10], 1
    %2111 = vsyncpa [#allocation13], 1
    %2112 = vsyncpa [#allocation16], 1
    %2113 = vsyncpa [#allocation8], 1
    %s2114 = scalar_lea.sflag [#allocation8], 1
    %2115 = vsyncpa %s2114, 1
    %2116 = vsyncpa [#allocation20], 1
    %s2117 = scalar_lea.sflag [#allocation20], 1
    %2118 = vsyncpa %s2117, 1

</llo_original>
